<compile_context>
chip_gen: v7x
topology: tpu7x:2x2x1
jax: 0.10.0
libtpu: 0.0.40
codegen_flags: <defaults>
</compile_context>

<pallas_src>
import jax
import jax.numpy as jnp
from jax import lax
from jax.experimental import pallas as pl
from jax.experimental.pallas import tpu as pltpu

INPUT_SIZE = 4
HIDDEN_SIZES = [128, 64, 32, 16]
OUTPUT_SIZE = 3  # stand-in for len(set(y_train))


def make_mlp_kernel(num_layers, in_features, out_features, compute_dtype):
    """Whole MLP forward for one batch tile, all operands VMEM-resident.

    refs:
      x_ref: (batch_tile, in_features) f32   — torch layout, batch on sublanes
      w_ref: (L, PAD, PAD)             bf16  — zero-padded torch (out, in) weights
      b_ref: (L, PAD, 1)               f32   — zero-padded bias column vectors
      o_ref: (out_features, batch_tile) f32  — lane-dense (batch-on-lanes) output
    """

    def kernel(x_ref, w_ref, b_ref, o_ref):
        # Layer 1: contract the tiny feature dim of both operands (trans_b form,
        # MXU handles it) -> (PAD, batch_tile). No host transpose/pad/cast of x.
        x = x_ref[...].astype(compute_dtype)                  # (T, in)  bf16
        w1 = w_ref[0, :, :in_features]                        # (PAD, in) bf16
        y = lax.dot_general(w1, x, (((1,), (1,)), ((), ())),
                            preferred_element_type=jnp.float32) + b_ref[0]
        if num_layers == 1:
            h = y
        else:
            h = jnp.maximum(y, 0.0).astype(compute_dtype)     # (PAD, T) bf16

        for l in range(1, num_layers):
            # Padded (PAD, PAD) @ (PAD, T) matmul; zero padding keeps it exact.
            y = jnp.dot(w_ref[l], h,
                        preferred_element_type=jnp.float32) + b_ref[l]
            if l < num_layers - 1:
                h = jnp.maximum(y, 0.0).astype(compute_dtype)  # bf16 activations
            else:
                h = y                                          # final Linear: no ReLU

        # Only the real output rows are stored; the store stays lane-dense.
        o_ref[...] = h[:out_features, :].astype(o_ref.dtype)

    return kernel


def pack_params(params, compute_dtype=jnp.bfloat16):
    """One-time setup: pack torch-shaped (W:(out,in), b:(out,)) layers into
    one zero-padded bf16 weight buffer and one f32 bias buffer."""
    dims = [params[0][0].shape[1]] + [w.shape[0] for w, _ in params]
    pad = max(128, ((max(dims) + 127) // 128) * 128)
    L = len(params)
    w_packed = jnp.zeros((L, pad, pad), compute_dtype)
    b_packed = jnp.zeros((L, pad, 1), jnp.float32)
    for l, (w, b) in enumerate(params):
        o, i = w.shape
        w_packed = w_packed.at[l, :o, :i].set(w.astype(compute_dtype))
        b_packed = b_packed.at[l, :o, 0].set(b.astype(jnp.float32))
    return w_packed, b_packed


def mlp_forward(x, w_packed, b_packed, out_features, *, batch_tile=None):
    """x: (B, in_features) f32 (torch layout). Returns (B, out_features) f32."""
    B, in_features = x.shape
    num_layers, pad, _ = w_packed.shape
    compute_dtype = w_packed.dtype

    if batch_tile is None:
        padded = pl.cdiv(B, 256) * 256
        if padded <= 256:
            batch_tile = padded                  # single step for tiny batches
        else:
            # Even, >=2-step grid (v7x megacore friendly); tiles in [256, 2048].
            # On v5e/v6e (single TC) pass batch_tile=padded explicitly instead.
            batch_tile = max(256, min(2048, (padded // 2 // 256) * 256))
    assert batch_tile % 128 == 0, "batch_tile must be a multiple of 128 (lanes)"

    grid = (pl.cdiv(B, batch_tile),)

    # Advisory cost estimate (padded matmul FLOPs; tiny either way).
    flops = 2 * B * (pad * in_features + (num_layers - 1) * pad * pad)
    bytes_accessed = int(
        x.size * x.dtype.itemsize
        + w_packed.size * w_packed.dtype.itemsize
        + b_packed.size * b_packed.dtype.itemsize
        + out_features * B * 4)

    out_t = pl.pallas_call(
        make_mlp_kernel(num_layers, in_features, out_features, compute_dtype),
        out_shape=jax.ShapeDtypeStruct((out_features, B), jnp.float32),
        grid_spec=pltpu.PrefetchScalarGridSpec(
            num_scalar_prefetch=0,
            grid=grid,
            in_specs=[
                # x tiled along the batch (sublane) axis; feature dim = full.
                pl.BlockSpec((batch_tile, in_features), lambda i: (i, 0)),
                # Packed weights / biases: constant index_map -> DMA'd once,
                # VMEM-resident across all grid steps.
                pl.BlockSpec(w_packed.shape, lambda i: (0, 0, 0)),
                pl.BlockSpec(b_packed.shape, lambda i: (0, 0, 0)),
            ],
            out_specs=pl.BlockSpec((out_features, batch_tile), lambda i: (0, i)),
        ),
        compiler_params=pltpu.CompilerParams(
            dimension_semantics=("parallel",)),
        cost_estimate=pl.CostEstimate(
            flops=flops, transcendentals=0, bytes_accessed=bytes_accessed),
    )(x, w_packed, b_packed)

    # Single tiny (out_features, B) transpose back to torch layout.
    return out_t.T


def init_params(key):
    """Deterministic init matching torch.nn.Linear shapes: W:(out,in), b:(out,)."""
    layer_sizes = [INPUT_SIZE] + HIDDEN_SIZES + [OUTPUT_SIZE]
    params = []
    for i in range(len(layer_sizes) - 1):
        fan_in, fan_out = layer_sizes[i], layer_sizes[i + 1]
        key, kw, kb = jax.random.split(key, 3)
        bound = 1.0 / jnp.sqrt(fan_in)
        w = jax.random.uniform(kw, (fan_out, fan_in), jnp.float32, -bound, bound)
        b = jax.random.uniform(kb, (fan_out,), jnp.float32, -bound, bound)
        params.append((w, b))
    return params


def mlp_reference(x, params, compute_dtype=jnp.float32):
    """Reference forward: y = x @ W.T + b, ReLU between layers.

    With compute_dtype=bf16 this mirrors the kernel's numerics (bf16 operands,
    f32 accumulation); with f32 it is the torch-equivalent pure-f32 forward.
    """
    h = x.astype(compute_dtype)
    n = len(params)
    for idx, (w, b) in enumerate(params):
        w_c = w.astype(compute_dtype)
        y = jnp.dot(h.astype(jnp.float32), w_c.astype(jnp.float32).T,
                    precision=jax.lax.Precision.HIGHEST) + b
        if idx < n - 1:
            y = jnp.maximum(y, 0.0)
            h = y.astype(compute_dtype)
        else:
            h = y
    return h


if __name__ == "__main__":
    key = jax.random.PRNGKey(0)
    key, kx = jax.random.split(key)

    # 512 rows -> auto batch_tile=256 -> 2 grid steps: even "parallel" grid so
    # both v7x TensorCores are active; only ~0.35us extra on v5e/v6e.
    batch = 512
    x = jax.random.normal(kx, (batch, INPUT_SIZE), jnp.float32)

    params = init_params(key)
    w_packed, b_packed = pack_params(params)   # one-time setup, not per call

    out = mlp_forward(x, w_packed, b_packed, OUTPUT_SIZE)
    out = jax.block_until_ready(out)
    assert out.shape == (batch, OUTPUT_SIZE)

    # Matched-rounding reference (bf16 operands, f32 accumulation). Tolerance
    # loosened vs 1e-4 since MXU accumulation order differs from XLA's dot.
    ref_bf16 = mlp_reference(x, params, compute_dtype=jnp.bfloat16)
    assert jnp.allclose(out, ref_bf16, atol=2e-3, rtol=2e-3), (
        float(jnp.abs(out - ref_bf16).max()))

    # Loose check against the pure-f32 (torch-equivalent) forward.
    ref_f32 = mlp_reference(x, params, compute_dtype=jnp.float32)
    assert jnp.allclose(out, ref_f32, atol=5e-2, rtol=5e-2)

    print("KERNEL_OK")
</pallas_src>

<mosaic_0001>
module attributes {stable_mosaic.version = 11 : i64} {
  func.func @kernel(%arg0: i32, %arg1: memref<256x4xf32, #tpu.memory_space<vmem>>, %arg2: memref<5x128x128xbf16, #tpu.memory_space<vmem>>, %arg3: memref<5x128x1xf32, #tpu.memory_space<vmem>>, %arg4: memref<3x256xf32, #tpu.memory_space<vmem>>) attributes {dimension_semantics = [#tpu.dimension_semantics<parallel>], iteration_bounds = array<i64: 2>, scalar_prefetch = 0 : i64, scratch_operands = 0 : i64, tpu.core_type = #tpu.core_type<tc>, window_params = [{transform_indices = @transform_0, window_bounds = array<i64: 256, 4>}, {pipeline_mode = #tpu.pipeline_mode<synchronous>, transform_indices = @transform_1, window_bounds = array<i64: 5, 128, 128>}, {pipeline_mode = #tpu.pipeline_mode<synchronous>, transform_indices = @transform_2, window_bounds = array<i64: 5, 128, 1>}, {transform_indices = @transform_3, window_bounds = array<i64: 3, 256>}]} {
    %c0 = arith.constant 0 : index
    %c0_0 = arith.constant 0 : index
    %0 = vector.load %arg1[%c0, %c0_0] : memref<256x4xf32, #tpu.memory_space<vmem>>, vector<256x4xf32>
    %1 = arith.truncf %0 : vector<256x4xf32> to vector<256x4xbf16>
    %c0_1 = arith.constant 0 : index
    %c0_2 = arith.constant 0 : index
    %c0_3 = arith.constant 0 : index
    %2 = vector.load %arg2[%c0_1, %c0_2, %c0_3] : memref<5x128x128xbf16, #tpu.memory_space<vmem>>, vector<1x128x4xbf16>
    %3 = vector.shape_cast %2 : vector<1x128x4xbf16> to vector<128x4xbf16>
    %cst = arith.constant dense<0.000000e+00> : vector<128x256xf32>
    %4 = tpu.matmul %3, %1, %cst {dimension_numbers = #tpu.dot_dimension_numbers<[1], [1], [0], [0], [0, 0, 1, 0], [], []>} : vector<128x4xbf16>, vector<256x4xbf16>, vector<128x256xf32> -> vector<128x256xf32>
    %c0_4 = arith.constant 0 : index
    %c0_5 = arith.constant 0 : index
    %c0_6 = arith.constant 0 : index
    %5 = vector.load %arg3[%c0_4, %c0_5, %c0_6] : memref<5x128x1xf32, #tpu.memory_space<vmem>>, vector<1x128x1xf32>
    %6 = vector.shape_cast %5 : vector<1x128x1xf32> to vector<128x1xf32>
    %7 = vector.broadcast %6 : vector<128x1xf32> to vector<128x256xf32>
    %8 = arith.addf %4, %7 : vector<128x256xf32>
    %cst_7 = arith.constant 0.000000e+00 : f32
    %9 = vector.broadcast %cst_7 : f32 to vector<128x256xf32>
    %10 = arith.maximumf %8, %9 : vector<128x256xf32>
    %11 = arith.truncf %10 : vector<128x256xf32> to vector<128x256xbf16>
    %c1 = arith.constant 1 : index
    %c0_8 = arith.constant 0 : index
    %c0_9 = arith.constant 0 : index
    %12 = vector.load %arg2[%c1, %c0_8, %c0_9] : memref<5x128x128xbf16, #tpu.memory_space<vmem>>, vector<1x128x128xbf16>
    %13 = vector.shape_cast %12 : vector<1x128x128xbf16> to vector<128x128xbf16>
    %cst_10 = arith.constant dense<0.000000e+00> : vector<128x256xf32>
    %14 = tpu.matmul %13, %11, %cst_10 {dimension_numbers = #tpu.dot_dimension_numbers<[1], [0], [0], [1], [0, 0, 1, 1], [], []>} : vector<128x128xbf16>, vector<128x256xbf16>, vector<128x256xf32> -> vector<128x256xf32>
    %c1_11 = arith.constant 1 : index
    %c0_12 = arith.constant 0 : index
    %c0_13 = arith.constant 0 : index
    %15 = vector.load %arg3[%c1_11, %c0_12, %c0_13] : memref<5x128x1xf32, #tpu.memory_space<vmem>>, vector<1x128x1xf32>
    %16 = vector.shape_cast %15 : vector<1x128x1xf32> to vector<128x1xf32>
    %17 = vector.broadcast %16 : vector<128x1xf32> to vector<128x256xf32>
    %18 = arith.addf %14, %17 : vector<128x256xf32>
    %cst_14 = arith.constant 0.000000e+00 : f32
    %19 = vector.broadcast %cst_14 : f32 to vector<128x256xf32>
    %20 = arith.maximumf %18, %19 : vector<128x256xf32>
    %21 = arith.truncf %20 : vector<128x256xf32> to vector<128x256xbf16>
    %c2 = arith.constant 2 : index
    %c0_15 = arith.constant 0 : index
    %c0_16 = arith.constant 0 : index
    %22 = vector.load %arg2[%c2, %c0_15, %c0_16] : memref<5x128x128xbf16, #tpu.memory_space<vmem>>, vector<1x128x128xbf16>
    %23 = vector.shape_cast %22 : vector<1x128x128xbf16> to vector<128x128xbf16>
    %cst_17 = arith.constant dense<0.000000e+00> : vector<128x256xf32>
    %24 = tpu.matmul %23, %21, %cst_17 {dimension_numbers = #tpu.dot_dimension_numbers<[1], [0], [0], [1], [0, 0, 1, 1], [], []>} : vector<128x128xbf16>, vector<128x256xbf16>, vector<128x256xf32> -> vector<128x256xf32>
    %c2_18 = arith.constant 2 : index
    %c0_19 = arith.constant 0 : index
    %c0_20 = arith.constant 0 : index
    %25 = vector.load %arg3[%c2_18, %c0_19, %c0_20] : memref<5x128x1xf32, #tpu.memory_space<vmem>>, vector<1x128x1xf32>
    %26 = vector.shape_cast %25 : vector<1x128x1xf32> to vector<128x1xf32>
    %27 = vector.broadcast %26 : vector<128x1xf32> to vector<128x256xf32>
    %28 = arith.addf %24, %27 : vector<128x256xf32>
    %cst_21 = arith.constant 0.000000e+00 : f32
    %29 = vector.broadcast %cst_21 : f32 to vector<128x256xf32>
    %30 = arith.maximumf %28, %29 : vector<128x256xf32>
    %31 = arith.truncf %30 : vector<128x256xf32> to vector<128x256xbf16>
    %c3 = arith.constant 3 : index
    %c0_22 = arith.constant 0 : index
    %c0_23 = arith.constant 0 : index
    %32 = vector.load %arg2[%c3, %c0_22, %c0_23] : memref<5x128x128xbf16, #tpu.memory_space<vmem>>, vector<1x128x128xbf16>
    %33 = vector.shape_cast %32 : vector<1x128x128xbf16> to vector<128x128xbf16>
    %cst_24 = arith.constant dense<0.000000e+00> : vector<128x256xf32>
    %34 = tpu.matmul %33, %31, %cst_24 {dimension_numbers = #tpu.dot_dimension_numbers<[1], [0], [0], [1], [0, 0, 1, 1], [], []>} : vector<128x128xbf16>, vector<128x256xbf16>, vector<128x256xf32> -> vector<128x256xf32>
    %c3_25 = arith.constant 3 : index
    %c0_26 = arith.constant 0 : index
    %c0_27 = arith.constant 0 : index
    %35 = vector.load %arg3[%c3_25, %c0_26, %c0_27] : memref<5x128x1xf32, #tpu.memory_space<vmem>>, vector<1x128x1xf32>
    %36 = vector.shape_cast %35 : vector<1x128x1xf32> to vector<128x1xf32>
    %37 = vector.broadcast %36 : vector<128x1xf32> to vector<128x256xf32>
    %38 = arith.addf %34, %37 : vector<128x256xf32>
    %cst_28 = arith.constant 0.000000e+00 : f32
    %39 = vector.broadcast %cst_28 : f32 to vector<128x256xf32>
    %40 = arith.maximumf %38, %39 : vector<128x256xf32>
    %41 = arith.truncf %40 : vector<128x256xf32> to vector<128x256xbf16>
    %c4 = arith.constant 4 : index
    %c0_29 = arith.constant 0 : index
    %c0_30 = arith.constant 0 : index
    %42 = vector.load %arg2[%c4, %c0_29, %c0_30] : memref<5x128x128xbf16, #tpu.memory_space<vmem>>, vector<1x128x128xbf16>
    %43 = vector.shape_cast %42 : vector<1x128x128xbf16> to vector<128x128xbf16>
    %cst_31 = arith.constant dense<0.000000e+00> : vector<128x256xf32>
    %44 = tpu.matmul %43, %41, %cst_31 {dimension_numbers = #tpu.dot_dimension_numbers<[1], [0], [0], [1], [0, 0, 1, 1], [], []>} : vector<128x128xbf16>, vector<128x256xbf16>, vector<128x256xf32> -> vector<128x256xf32>
    %c4_32 = arith.constant 4 : index
    %c0_33 = arith.constant 0 : index
    %c0_34 = arith.constant 0 : index
    %45 = vector.load %arg3[%c4_32, %c0_33, %c0_34] : memref<5x128x1xf32, #tpu.memory_space<vmem>>, vector<1x128x1xf32>
    %46 = vector.shape_cast %45 : vector<1x128x1xf32> to vector<128x1xf32>
    %47 = vector.broadcast %46 : vector<128x1xf32> to vector<128x256xf32>
    %48 = arith.addf %44, %47 : vector<128x256xf32>
    %49 = vector.extract_strided_slice %48 {offsets = [0, 0], sizes = [3, 256], strides = [1, 1]} : vector<128x256xf32> to vector<3x256xf32>
    %c0_35 = arith.constant 0 : index
    %c0_36 = arith.constant 0 : index
    %50 = vector.load %arg4[%c0_35, %c0_36] : memref<3x256xf32, #tpu.memory_space<vmem>>, vector<3x256xf32>
    tpu.vector_store %arg4[%c0_35, %c0_36], %49 {strides = array<i32>} : memref<3x256xf32, #tpu.memory_space<vmem>>, vector<3x256xf32>,
    return
  }
  func.func @transform_0(%arg0: i32) -> (i32, i32) {
    %c0_i32 = arith.constant 0 : i32
    %c0_i32_0 = arith.constant 0 : i32
    return %arg0, %c0_i32 : i32, i32
  }
  func.func @transform_1(%arg0: i32) -> (i32, i32, i32) {
    %c0_i32 = arith.constant 0 : i32
    %c0_i32_0 = arith.constant 0 : i32
    %c0_i32_1 = arith.constant 0 : i32
    %c0_i32_2 = arith.constant 0 : i32
    return %c0_i32, %c0_i32_0, %c0_i32_1 : i32, i32, i32
  }
  func.func @transform_2(%arg0: i32) -> (i32, i32, i32) {
    %c0_i32 = arith.constant 0 : i32
    %c0_i32_0 = arith.constant 0 : i32
    %c0_i32_1 = arith.constant 0 : i32
    %c0_i32_2 = arith.constant 0 : i32
    return %c0_i32, %c0_i32_0, %c0_i32_1 : i32, i32, i32
  }
  func.func @transform_3(%arg0: i32) -> (i32, i32) {
    %c0_i32 = arith.constant 0 : i32
    %c0_i32_0 = arith.constant 0 : i32
    return %c0_i32, %arg0 : i32, i32
  }
}

</mosaic_0001>

<llo_original>
// kernel: tpu_custom_call.1
$region0: #{tpu_custom_call.1}
  #allocation0 [shape = 'u32[]', space=smem, size = 0x4, offset = 0x4, fixed_abs, tag = 'smem constant byte address 0x4 - core index']
  #allocation1 [shape = 'u32[144,128]{1,0:T(1,128)}', space=vmem, size = 0x12000, scoped, tag = 'internal scratch']
  %s0 = inlined_call_operand.vmem [shape: f32[512,4], index: 0, kind: input, shape index: {}]
  %s1 = inlined_call_operand.vmem [shape: bf16[5,128,128], index: 1, kind: input, shape index: {}]
  %s2 = inlined_call_operand.vmem [shape: f32[5,128,1], index: 2, kind: input, shape index: {}]
  %s3 = inlined_call_operand.hbm [shape: f32[3,512], index: 3, kind: output, shape index: {}]
  %s4 = sld [smem:[#allocation0]]
  $region45: #{tpu_custom_call.1} parent=0
    _
  %s6 = ssub.s32 1, %s4
  %s7 = scalar_select 0, %s6, %s4
  $region1: #{tpu_custom_call.1} parent=0
    #allocation2 [shape = 'u8[8192]{0}', space=vmem, size = 0x2000, scoped, tag = 'output window, operand 0']
    #allocation3 [shape = 's32[2]{0}', space=sflag, size = 0x8, scoped, tag = 'scoped memory for tpu_custom_call.1']
    %8 = vsyncpa [#allocation3], 0
    %s9 = scalar_lea.sflag [#allocation3], 1
    %10 = vsyncpa %s9, 0
    loop: start=0, step=1, limit=4
    $region2: #{tpu_custom_call.1} parent=1 // loop_pre_header
      _
    $region3: #{tpu_custom_call.1} parent=1 // loop_header
      %s12 = sphi 0, %s16
      %p13 = scmp.ge.s32.totalorder %s12, 4
      %s22 = sphi 0, %s24
      %s25 = sphi 0, %s22
      %s26 = sphi 0, %s25
      %s42 = sphi 0, %s26
      %s46 = sphi 0, %s46
      %s48 = sphi 0, %s46
      %s49 = sphi 0, %s48
      %s63 = sphi 0, %s49
      %s67 = sphi 0, %s67
      %s69 = sphi 0, %s67
      %s70 = sphi 0, %s69
      %s84 = sphi 0, %s70
      %s90 = sphi 0, %s92
      %s93 = sphi 0, %s90
      %s94 = sphi 0, %s93
      %s110 = sphi 0, %s94
    $region4: #{tpu_custom_call.1} parent=1 // loop_header_branch
      %15 = sbr.rel (%p13) target = $region8
    $region5: #{tpu_custom_call.1} parent=1 // loop_body
      %s17 = ssub.s32 %s12, 1
      %s18 = ssub.s32 %s12, 2
      %s19 = sadd.s32 %s12, 1
      %s20 = ssub.s32 %s12, %s19
      %p21 = scmp.eq.s32.totalorder %s20, 0
      %s23 = sadd.s32 %s22, 1
      %s24 = scalar_select %p21, %s22, %s23
      %p27 = pneg %p21
      %p28 = scmp.eq.s32.totalorder %s12, 1
      %p29 = por %p27, %p28
      %p30 = scmp.ne.s32.totalorder %s22, %s25
      %p31 = scmp.eq.s32.totalorder %s12, 0
      %p32 = por %p30, %p31
      %p33 = scmp.ne.s32.totalorder %s22, %s25
      %p34 = scmp.eq.s32.totalorder %s17, 1
      %p35 = por %p33, %p34
      %p36 = scmp.ne.s32.totalorder %s25, %s26
      %p37 = scmp.eq.s32.totalorder %s17, 0
      %p38 = por %p36, %p37
      %p39 = scmp.ne.s32.totalorder %s25, %s26
      %p40 = scmp.eq.s32.totalorder %s18, 1
      %p41 = por %p39, %p40
      %p43 = scmp.ne.s32.totalorder %s26, %s42
      %p44 = scmp.eq.s32.totalorder %s18, 0
      %p45 = por %p43, %p44
      %s47 = sadd.s32 %s46, 1
      %p50 = scmp.eq.s32.totalorder %s12, 1
      %p51 = scmp.ne.s32.totalorder %s46, %s48
      %p52 = scmp.eq.s32.totalorder %s12, 0
      %p53 = por %p51, %p52
      %p54 = scmp.ne.s32.totalorder %s46, %s48
      %p55 = scmp.eq.s32.totalorder %s17, 1
      %p56 = por %p54, %p55
      %p57 = scmp.ne.s32.totalorder %s48, %s49
      %p58 = scmp.eq.s32.totalorder %s17, 0
      %p59 = por %p57, %p58
      %p60 = scmp.ne.s32.totalorder %s48, %s49
      %p61 = scmp.eq.s32.totalorder %s18, 1
      %p62 = por %p60, %p61
      %p64 = scmp.ne.s32.totalorder %s49, %s63
      %p65 = scmp.eq.s32.totalorder %s18, 0
      %p66 = por %p64, %p65
      %s68 = sadd.s32 %s67, 1
      %p71 = scmp.eq.s32.totalorder %s12, 1
      %p72 = scmp.ne.s32.totalorder %s67, %s69
      %p73 = scmp.eq.s32.totalorder %s12, 0
      %p74 = por %p72, %p73
      %p75 = scmp.ne.s32.totalorder %s67, %s69
      %p76 = scmp.eq.s32.totalorder %s17, 1
      %p77 = por %p75, %p76
      %p78 = scmp.ne.s32.totalorder %s69, %s70
      %p79 = scmp.eq.s32.totalorder %s17, 0
      %p80 = por %p78, %p79
      %p81 = scmp.ne.s32.totalorder %s69, %s70
      %p82 = scmp.eq.s32.totalorder %s18, 1
      %p83 = por %p81, %p82
      %p85 = scmp.ne.s32.totalorder %s70, %s84
      %p86 = scmp.eq.s32.totalorder %s18, 0
      %p87 = por %p85, %p86
      %s88 = ssub.s32 %s12, %s19
      %p89 = scmp.eq.s32.totalorder %s88, 0
      %s91 = sadd.s32 %s90, 1
      %s92 = scalar_select %p89, %s90, %s91
      %p95 = pneg %p89
      %p96 = scmp.eq.s32.totalorder %s12, 1
      %p97 = por %p95, %p96
      %p98 = scmp.ne.s32.totalorder %s90, %s93
      %p99 = scmp.eq.s32.totalorder %s12, 0
      %p100 = por %p98, %p99
      %p101 = scmp.ne.s32.totalorder %s90, %s93
      %p102 = scmp.eq.s32.totalorder %s17, 1
      %p103 = por %p101, %p102
      %p104 = scmp.ne.s32.totalorder %s93, %s94
      %p105 = scmp.eq.s32.totalorder %s17, 0
      %p106 = por %p104, %p105
      %p107 = scmp.ne.s32.totalorder %s93, %s94
      %p108 = scmp.eq.s32.totalorder %s18, 1
      %p109 = por %p107, %p108
      %p111 = scmp.ne.s32.totalorder %s94, %s110
      %p112 = scmp.eq.s32.totalorder %s18, 0
      %p113 = por %p111, %p112
      %p114 = scmp.le.s32.totalorder 1, %s12
      %p115 = scmp.lt.s32.totalorder %s12, 3
      %p116 = pnand %p114, %p115
      %p117 = pneg %p116
      // Predicated region
      $region9: #{tpu_custom_call.1} parent=5 // pred_check
        _
      $region10: #{tpu_custom_call.1} parent=5 // pred_check_branch
        %119 = sbr.rel (%p116) target = $region12
      $region11: #{tpu_custom_call.1} parent=5 // pred_region
        %s120 = ssub.s32 %s12, 1
        // Predicated region
        $region13: #{tpu_custom_call.1} parent=11 // pred_check
          %p121 = pneg %p59
        $region14: #{tpu_custom_call.1} parent=11 // pred_check_branch
          %123 = sbr.rel (%p121) target = $region16
        $region15: #{tpu_custom_call.1} parent=11 // pred_region
          _
        $region16: #{tpu_custom_call.1} parent=11 // pred_fallthru
          _
        // Predicated region
        $region17: #{tpu_custom_call.1} parent=11 // pred_check
          %p124 = pneg %p80
        $region18: #{tpu_custom_call.1} parent=11 // pred_check_branch
          %126 = sbr.rel (%p124) target = $region20
        $region19: #{tpu_custom_call.1} parent=11 // pred_region
          _
        $region20: #{tpu_custom_call.1} parent=11 // pred_fallthru
          _
      $region12: #{tpu_custom_call.1} parent=5 // pred_fallthru
        _
      %p127 = scmp.lt.s32.totalorder %s12, 2
      // Predicated region
      $region21: #{tpu_custom_call.1} parent=5 // pred_check
        %p128 = pneg %p127
      $region22: #{tpu_custom_call.1} parent=5 // pred_check_branch
        %130 = sbr.rel (%p128) target = $region24
      $region23: #{tpu_custom_call.1} parent=5 // pred_region
        // Predicated region
        $region25: #{tpu_custom_call.1} parent=23 // pred_check
          %p131 = pneg %p32
        $region26: #{tpu_custom_call.1} parent=23 // pred_check_branch
          %133 = sbr.rel (%p131) target = $region28
        $region27: #{tpu_custom_call.1} parent=23 // pred_region
          %s134 = smul.u32 32, %s12
          %p135 = scmp.lt.s32.totalorder %s134, 63
          %s136 = scalar_select %p135, %s134, 63
          %s137 = smul.addr %s136, 8
          %s138 = scalar_lea.vmem %s0, %s137
          %s139 = smul.u32 32, %s12
        $region28: #{tpu_custom_call.1} parent=23 // pred_fallthru
          _
      $region24: #{tpu_custom_call.1} parent=5 // pred_fallthru
        _
      %p140 = scmp.le.s32.totalorder 1, %s12
      %p141 = scmp.lt.s32.totalorder %s12, 3
      %p142 = pnand %p140, %p141
      %p143 = pneg %p142
      // Predicated region
      $region29: #{tpu_custom_call.1} parent=5 // pred_check
        _
      $region30: #{tpu_custom_call.1} parent=5 // pred_check_branch
        %145 = sbr.rel (%p142) target = $region32
      $region31: #{tpu_custom_call.1} parent=5 // pred_region
        %s146 = ssub.s32 %s12, 1
        %s147 = smul.u32 32, %s17
        %p148 = scmp.lt.s32.totalorder %s147, 63
        %s149 = scalar_select %p148, %s147, 63
        %s150 = smul.addr %s149, 8
        %s151 = scalar_lea.vmem %s0, %s150
        %p152 = pneg %p38
        %p153 = pneg %p35
        %p154 = pneg %p59
        %p155 = pneg %p56
        %p156 = pneg %p80
        %p157 = pneg %p77
        %p158 = pneg %p106
        %p159 = pneg %p103
        %s160 = sand.u32 %s93, 1
        %s161 = scalar_lea.sflag [#allocation3], %s160
        %s162 = sand.u32 %s93, 1
        %s163 = smul.addr %s162, 8
        %s164 = scalar_lea.vmem [#allocation2], %s163
        %s165 = smul.u32 32, %s17
        %p166 = scmp.lt.s32.totalorder %s165, 63
        %s167 = scalar_select %p166, %s165, 63
        %s168 = smul.addr %s167, 8
        %s169 = scalar_lea.vmem %s0, %s168
        %s170 = smul.u32 32, %s17
        %s171 = smul.u32 2, %s17
        %v173 = vld [vmem:[%s169] sm:$0xff]
        %v174 = vld [vmem:[%s169 + $0x8] sm:$0xff]
        %v175 = vld [vmem:[%s169 + $0x10] sm:$0xff]
        %v176 = vld [vmem:[%s169 + $0x18] sm:$0xff]
        %v177 = vld [vmem:[%s169 + $0x20] sm:$0xff]
        %v178 = vld [vmem:[%s169 + $0x28] sm:$0xff]
        %v179 = vld [vmem:[%s169 + $0x30] sm:$0xff]
        %v180 = vld [vmem:[%s169 + $0x38] sm:$0xff]
        %v181 = vld [vmem:[%s169 + $0x40] sm:$0xff]
        %v182 = vld [vmem:[%s169 + $0x48] sm:$0xff]
        %v183 = vld [vmem:[%s169 + $0x50] sm:$0xff]
        %v184 = vld [vmem:[%s169 + $0x58] sm:$0xff]
        %v185 = vld [vmem:[%s169 + $0x60] sm:$0xff]
        %v186 = vld [vmem:[%s169 + $0x68] sm:$0xff]
        %v187 = vld [vmem:[%s169 + $0x70] sm:$0xff]
        %v188 = vld [vmem:[%s169 + $0x78] sm:$0xff]
        %v189 = vld [vmem:[%s169 + $0x80] sm:$0xff]
        %v190 = vld [vmem:[%s169 + $0x88] sm:$0xff]
        %v191 = vld [vmem:[%s169 + $0x90] sm:$0xff]
        %v192 = vld [vmem:[%s169 + $0x98] sm:$0xff]
        %v193 = vld [vmem:[%s169 + $0xa0] sm:$0xff]
        %v194 = vld [vmem:[%s169 + $0xa8] sm:$0xff]
        %v195 = vld [vmem:[%s169 + $0xb0] sm:$0xff]
        %v196 = vld [vmem:[%s169 + $0xb8] sm:$0xff]
        %v197 = vld [vmem:[%s169 + $0xc0] sm:$0xff]
        %v198 = vld [vmem:[%s169 + $0xc8] sm:$0xff]
        %v199 = vld [vmem:[%s169 + $0xd0] sm:$0xff]
        %v200 = vld [vmem:[%s169 + $0xd8] sm:$0xff]
        %v201 = vld [vmem:[%s169 + $0xe0] sm:$0xff]
        %v202 = vld [vmem:[%s169 + $0xe8] sm:$0xff]
        %v203 = vld [vmem:[%s169 + $0xf0] sm:$0xff]
        %v204 = vld [vmem:[%s169 + $0xf8] sm:$0xff]
        %v205 = vpack.c.bf16 %v174, %v173
        %v206 = vpack.c.bf16 %v176, %v175
        %v207 = vpack.c.bf16 %v178, %v177
        %v208 = vpack.c.bf16 %v180, %v179
        %v209 = vpack.c.bf16 %v182, %v181
        %v210 = vpack.c.bf16 %v184, %v183
        %v211 = vpack.c.bf16 %v186, %v185
        %v212 = vpack.c.bf16 %v188, %v187
        %v213 = vpack.c.bf16 %v190, %v189
        %v214 = vpack.c.bf16 %v192, %v191
        %v215 = vpack.c.bf16 %v194, %v193
        %v216 = vpack.c.bf16 %v196, %v195
        %v217 = vpack.c.bf16 %v198, %v197
        %v218 = vpack.c.bf16 %v200, %v199
        %v219 = vpack.c.bf16 %v202, %v201
        %v220 = vpack.c.bf16 %v204, %v203
        %v221 = vld [vmem:[%s1] sm:$0xf]
        %v222 = vld [vmem:[%s1 + $0x4] sm:$0xf]
        %v223 = vld [vmem:[%s1 + $0x8] sm:$0xf]
        %v224 = vld [vmem:[%s1 + $0xc] sm:$0xf]
        %v225 = vld [vmem:[%s1 + $0x10] sm:$0xf]
        %v226 = vld [vmem:[%s1 + $0x14] sm:$0xf]
        %v227 = vld [vmem:[%s1 + $0x18] sm:$0xf]
        %v228 = vld [vmem:[%s1 + $0x1c] sm:$0xf]
        %v229 = vld [vmem:[%s1 + $0x20] sm:$0xf]
        %v230 = vld [vmem:[%s1 + $0x24] sm:$0xf]
        %v231 = vld [vmem:[%s1 + $0x28] sm:$0xf]
        %v232 = vld [vmem:[%s1 + $0x2c] sm:$0xf]
        %v233 = vld [vmem:[%s1 + $0x30] sm:$0xf]
        %v234 = vld [vmem:[%s1 + $0x34] sm:$0xf]
        %v235 = vld [vmem:[%s1 + $0x38] sm:$0xf]
        %v236 = vld [vmem:[%s1 + $0x3c] sm:$0xf]
        %v237 = vld [vmem:[%s2] sm:$0xff]
        %v238 = vld [vmem:[%s2 + $0x8] sm:$0xff]
        %v239 = vld [vmem:[%s2 + $0x10] sm:$0xff]
        %v240 = vld [vmem:[%s2 + $0x18] sm:$0xff]
        %v241 = vld [vmem:[%s2 + $0x20] sm:$0xff]
        %v242 = vld [vmem:[%s2 + $0x28] sm:$0xff]
        %v243 = vld [vmem:[%s2 + $0x30] sm:$0xff]
        %v244 = vld [vmem:[%s2 + $0x38] sm:$0xff]
        %v245 = vld [vmem:[%s2 + $0x40] sm:$0xff]
        %v246 = vld [vmem:[%s2 + $0x48] sm:$0xff]
        %v247 = vld [vmem:[%s2 + $0x50] sm:$0xff]
        %v248 = vld [vmem:[%s2 + $0x58] sm:$0xff]
        %v249 = vld [vmem:[%s2 + $0x60] sm:$0xff]
        %v250 = vld [vmem:[%s2 + $0x68] sm:$0xff]
        %v251 = vld [vmem:[%s2 + $0x70] sm:$0xff]
        %v252 = vld [vmem:[%s2 + $0x78] sm:$0xff]
        %254 = vset.pattern.permute.xlu0 0
        %255 = vperm.xlu0 %254, %v237
        %v256 = vpop.permute.xlu0 %255
        %259 = vset.pattern.permute.xlu0 0
        %260 = vperm.xlu0 %259, %v238
        %v261 = vpop.permute.xlu0 %260
        %264 = vset.pattern.permute.xlu0 0
        %265 = vperm.xlu0 %264, %v239
        %v266 = vpop.permute.xlu0 %265
        %269 = vset.pattern.permute.xlu0 0
        %270 = vperm.xlu0 %269, %v240
        %v271 = vpop.permute.xlu0 %270
        %274 = vset.pattern.permute.xlu0 0
        %275 = vperm.xlu0 %274, %v241
        %v276 = vpop.permute.xlu0 %275
        %279 = vset.pattern.permute.xlu0 0
        %280 = vperm.xlu0 %279, %v242
        %v281 = vpop.permute.xlu0 %280
        %284 = vset.pattern.permute.xlu0 0
        %285 = vperm.xlu0 %284, %v243
        %v286 = vpop.permute.xlu0 %285
        %289 = vset.pattern.permute.xlu0 0
        %290 = vperm.xlu0 %289, %v244
        %v291 = vpop.permute.xlu0 %290
        %294 = vset.pattern.permute.xlu0 0
        %295 = vperm.xlu0 %294, %v245
        %v296 = vpop.permute.xlu0 %295
        %299 = vset.pattern.permute.xlu0 0
        %300 = vperm.xlu0 %299, %v246
        %v301 = vpop.permute.xlu0 %300
        %304 = vset.pattern.permute.xlu0 0
        %305 = vperm.xlu0 %304, %v247
        %v306 = vpop.permute.xlu0 %305
        %309 = vset.pattern.permute.xlu0 0
        %310 = vperm.xlu0 %309, %v248
        %v311 = vpop.permute.xlu0 %310
        %314 = vset.pattern.permute.xlu0 0
        %315 = vperm.xlu0 %314, %v249
        %v316 = vpop.permute.xlu0 %315
        %319 = vset.pattern.permute.xlu0 0
        %320 = vperm.xlu0 %319, %v250
        %v321 = vpop.permute.xlu0 %320
        %324 = vset.pattern.permute.xlu0 0
        %325 = vperm.xlu0 %324, %v251
        %v326 = vpop.permute.xlu0 %325
        %329 = vset.pattern.permute.xlu0 0
        %330 = vperm.xlu0 %329, %v252
        %v331 = vpop.permute.xlu0 %330
        %v349 = vunpack.c.l.b16 %v221
        %v350 = vunpack.c.l.b16 %v222
        %v351 = vunpack.c.l.b16 %v223
        %v352 = vunpack.c.l.b16 %v224
        %v353 = vunpack.c.l.b16 %v225
        %v354 = vunpack.c.l.b16 %v226
        %v355 = vunpack.c.l.b16 %v227
        %v356 = vunpack.c.l.b16 %v228
        %v357 = vunpack.c.l.b16 %v229
        %v358 = vunpack.c.l.b16 %v230
        %v359 = vunpack.c.l.b16 %v231
        %v360 = vunpack.c.l.b16 %v232
        %v361 = vunpack.c.l.b16 %v233
        %v362 = vunpack.c.l.b16 %v234
        %v363 = vunpack.c.l.b16 %v235
        %v364 = vunpack.c.l.b16 %v236
        %v365 = vpack.c.b16 %v350, %v349
        %v366 = vpack.c.b16 %v352, %v351
        %v367 = vpack.c.b16 %v354, %v353
        %v368 = vpack.c.b16 %v356, %v355
        %v369 = vpack.c.b16 %v358, %v357
        %v370 = vpack.c.b16 %v360, %v359
        %v371 = vpack.c.b16 %v362, %v361
        %v372 = vpack.c.b16 %v364, %v363
        %vm373 = vcmask 31744
        %v375 = vsel %vm373, %v365, 0
        %v378 = vsel %vm373, %v366, 0
        %v381 = vsel %vm373, %v367, 0
        %v384 = vsel %vm373, %v368, 0
        %v387 = vsel %vm373, %v369, 0
        %v390 = vsel %vm373, %v370, 0
        %v393 = vsel %vm373, %v371, 0
        %v396 = vsel %vm373, %v372, 0
        %v399 = vsel %vm373, %v205, 0
        %v402 = vsel %vm373, %v206, 0
        %v405 = vsel %vm373, %v207, 0
        %v408 = vsel %vm373, %v208, 0
        %v411 = vsel %vm373, %v209, 0
        %v414 = vsel %vm373, %v210, 0
        %v417 = vsel %vm373, %v211, 0
        %v420 = vsel %vm373, %v212, 0
        %v423 = vsel %vm373, %v213, 0
        %v426 = vsel %vm373, %v214, 0
        %v429 = vsel %vm373, %v215, 0
        %v432 = vsel %vm373, %v216, 0
        %v435 = vsel %vm373, %v217, 0
        %v438 = vsel %vm373, %v218, 0
        %v441 = vsel %vm373, %v219, 0
        %v444 = vsel %vm373, %v220, 0
        %446 = vmatprep.subr.bf16.mxu0 0
        %447 = vmatpush1.bf16.xpose.msra.mxu0 %v399
        %448 = vmatprep.subr.bf16.mxu0 0
        %449 = vmatpush1.bf16.xpose.msra.mxu0 %v402
        %450 = vmatprep.subr.bf16.mxu0 0
        %451 = vmatpush1.bf16.xpose.msra.mxu0 %v405
        %452 = vmatprep.subr.bf16.mxu0 0
        %453 = vmatpush1.bf16.xpose.msra.mxu0 %v408
        %454 = vmatprep.subr.bf16.mxu0 0
        %455 = vmatpush1.bf16.xpose.msra.mxu0 %v411
        %456 = vmatprep.subr.bf16.mxu0 0
        %457 = vmatpush1.bf16.xpose.msra.mxu0 %v414
        %458 = vmatprep.subr.bf16.mxu0 0
        %459 = vmatpush1.bf16.xpose.msra.mxu0 %v417
        %460 = vmatprep.subr.bf16.mxu0 0
        %461 = vmatpush1.bf16.xpose.msra.mxu0 %v420
        %462 = vmatprep.subr.bf16.mxu0 0
        %463 = vmatpush1.bf16.xpose.msra.mxu0 %v423
        %464 = vmatprep.subr.bf16.mxu0 0
        %465 = vmatpush1.bf16.xpose.msra.mxu0 %v426
        %466 = vmatprep.subr.bf16.mxu0 0
        %467 = vmatpush1.bf16.xpose.msra.mxu0 %v429
        %468 = vmatprep.subr.bf16.mxu0 0
        %469 = vmatpush1.bf16.xpose.msra.mxu0 %v432
        %470 = vmatprep.subr.bf16.mxu0 0
        %471 = vmatpush1.bf16.xpose.msra.mxu0 %v435
        %472 = vmatprep.subr.bf16.mxu0 0
        %473 = vmatpush1.bf16.xpose.msra.mxu0 %v438
        %474 = vmatprep.subr.bf16.mxu0 0
        %475 = vmatpush1.bf16.xpose.msra.mxu0 %v441
        %476 = vmatprep.subr.bf16.mxu0 0
        %477 = vmatpush1.bf16.xpose.msra.mxu0 %v444
        %478 = vmatprep.mubr.bf16.mxu0 0
        %479 = vmatmul.mubr.bf16.gmra.mrb[0].mxu0 %v375
        %v480 = vpop.f32.mrb[0].mxu0
        %v481 = vadd.f32 %v256, %v480
        %v482 = vpop.f32.mrb[0].mxu0
        %v483 = vadd.f32 %v256, %v482
        %v484 = vpop.f32.mrb[0].mxu0
        %v485 = vadd.f32 %v261, %v484
        %v486 = vpop.f32.mrb[0].mxu0
        %v487 = vadd.f32 %v261, %v486
        %488 = vmatprep.mubr.bf16.mxu0 0
        %489 = vmatmul.mubr.bf16.gmra.mrb[0].mxu0 %v378
        %v490 = vpop.f32.mrb[0].mxu0
        %v491 = vadd.f32 %v266, %v490
        %v492 = vpop.f32.mrb[0].mxu0
        %v493 = vadd.f32 %v266, %v492
        %v494 = vpop.f32.mrb[0].mxu0
        %v495 = vadd.f32 %v271, %v494
        %v496 = vpop.f32.mrb[0].mxu0
        %v497 = vadd.f32 %v271, %v496
        %498 = vmatprep.mubr.bf16.mxu0 0
        %499 = vmatmul.mubr.bf16.gmra.mrb[0].mxu0 %v381
        %v500 = vpop.f32.mrb[0].mxu0
        %v501 = vadd.f32 %v276, %v500
        %v502 = vpop.f32.mrb[0].mxu0
        %v503 = vadd.f32 %v276, %v502
        %v504 = vpop.f32.mrb[0].mxu0
        %v505 = vadd.f32 %v281, %v504
        %v506 = vpop.f32.mrb[0].mxu0
        %v507 = vadd.f32 %v281, %v506
        %508 = vmatprep.mubr.bf16.mxu0 0
        %509 = vmatmul.mubr.bf16.gmra.mrb[0].mxu0 %v384
        %v510 = vpop.f32.mrb[0].mxu0
        %v511 = vadd.f32 %v286, %v510
        %v512 = vpop.f32.mrb[0].mxu0
        %v513 = vadd.f32 %v286, %v512
        %v514 = vpop.f32.mrb[0].mxu0
        %v515 = vadd.f32 %v291, %v514
        %v516 = vpop.f32.mrb[0].mxu0
        %v517 = vadd.f32 %v291, %v516
        %518 = vmatprep.mubr.bf16.mxu0 0
        %519 = vmatmul.mubr.bf16.gmra.mrb[0].mxu0 %v387
        %v520 = vpop.f32.mrb[0].mxu0
        %v521 = vadd.f32 %v296, %v520
        %v522 = vpop.f32.mrb[0].mxu0
        %v523 = vadd.f32 %v296, %v522
        %v524 = vpop.f32.mrb[0].mxu0
        %v525 = vadd.f32 %v301, %v524
        %v526 = vpop.f32.mrb[0].mxu0
        %v527 = vadd.f32 %v301, %v526
        %528 = vmatprep.mubr.bf16.mxu0 0
        %529 = vmatmul.mubr.bf16.gmra.mrb[0].mxu0 %v390
        %v530 = vpop.f32.mrb[0].mxu0
        %v531 = vadd.f32 %v306, %v530
        %v532 = vpop.f32.mrb[0].mxu0
        %v533 = vadd.f32 %v306, %v532
        %v534 = vpop.f32.mrb[0].mxu0
        %v535 = vadd.f32 %v311, %v534
        %v536 = vpop.f32.mrb[0].mxu0
        %v537 = vadd.f32 %v311, %v536
        %538 = vmatprep.mubr.bf16.mxu0 0
        %539 = vmatmul.mubr.bf16.gmra.mrb[0].mxu0 %v393
        %v540 = vpop.f32.mrb[0].mxu0
        %v541 = vadd.f32 %v316, %v540
        %v542 = vpop.f32.mrb[0].mxu0
        %v543 = vadd.f32 %v316, %v542
        %v544 = vpop.f32.mrb[0].mxu0
        %v545 = vadd.f32 %v321, %v544
        %v546 = vpop.f32.mrb[0].mxu0
        %v547 = vadd.f32 %v321, %v546
        %548 = vmatprep.mubr.bf16.mxu0 0
        %549 = vmatmul.mubr.bf16.gmra.mrb[0].mxu0 %v396
        %v550 = vpop.f32.mrb[0].mxu0
        %v551 = vadd.f32 %v326, %v550
        %v552 = vpop.f32.mrb[0].mxu0
        %v553 = vadd.f32 %v326, %v552
        %v554 = vpop.f32.mrb[0].mxu0
        %v555 = vadd.f32 %v331, %v554
        %v556 = vpop.f32.mrb[0].mxu0
        %v557 = vadd.f32 %v331, %v556
        %558 = vdwg.mxu0
        %v559 = vmax.f32 %v481, 0.0
        %v560 = vmax.f32 %v483, 0.0
        %v561 = vmax.f32 %v485, 0.0
        %v562 = vmax.f32 %v487, 0.0
        %v563 = vmax.f32 %v491, 0.0
        %v564 = vmax.f32 %v493, 0.0
        %v565 = vmax.f32 %v495, 0.0
        %v566 = vmax.f32 %v497, 0.0
        %v567 = vmax.f32 %v501, 0.0
        %v568 = vmax.f32 %v503, 0.0
        %v569 = vmax.f32 %v505, 0.0
        %v570 = vmax.f32 %v507, 0.0
        %v571 = vmax.f32 %v511, 0.0
        %v572 = vmax.f32 %v513, 0.0
        %v573 = vmax.f32 %v515, 0.0
        %v574 = vmax.f32 %v517, 0.0
        %v575 = vmax.f32 %v521, 0.0
        %v576 = vmax.f32 %v523, 0.0
        %v577 = vmax.f32 %v525, 0.0
        %v578 = vmax.f32 %v527, 0.0
        %v579 = vmax.f32 %v531, 0.0
        %v580 = vmax.f32 %v533, 0.0
        %v581 = vmax.f32 %v535, 0.0
        %v582 = vmax.f32 %v537, 0.0
        %v583 = vmax.f32 %v541, 0.0
        %v584 = vmax.f32 %v543, 0.0
        %v585 = vmax.f32 %v545, 0.0
        %v586 = vmax.f32 %v547, 0.0
        %v587 = vmax.f32 %v551, 0.0
        %v588 = vmax.f32 %v553, 0.0
        %v589 = vmax.f32 %v555, 0.0
        %v590 = vmax.f32 %v557, 0.0
        %v591 = vpack.c.bf16 %v561, %v559
        %v592 = vpack.c.bf16 %v562, %v560
        %v593 = vpack.c.bf16 %v565, %v563
        %v594 = vpack.c.bf16 %v566, %v564
        %v595 = vpack.c.bf16 %v569, %v567
        %v596 = vpack.c.bf16 %v570, %v568
        %v597 = vpack.c.bf16 %v573, %v571
        %v598 = vpack.c.bf16 %v574, %v572
        %v599 = vpack.c.bf16 %v577, %v575
        %v600 = vpack.c.bf16 %v578, %v576
        %v601 = vpack.c.bf16 %v581, %v579
        %v602 = vpack.c.bf16 %v582, %v580
        %v603 = vpack.c.bf16 %v585, %v583
        %v604 = vpack.c.bf16 %v586, %v584
        %v605 = vpack.c.bf16 %v589, %v587
        %v606 = vpack.c.bf16 %v590, %v588
        %s607 = scalar_lea.vmem %s1, 64
        %v608 = vld [vmem:[%s607] sm:$0xf]
        %v609 = vld [vmem:[%s607 + $0x4] sm:$0xf]
        %v610 = vld [vmem:[%s607 + $0x8] sm:$0xf]
        %v611 = vld [vmem:[%s607 + $0xc] sm:$0xf]
        %v612 = vld [vmem:[%s607 + $0x10] sm:$0xf]
        %v613 = vld [vmem:[%s607 + $0x14] sm:$0xf]
        %v614 = vld [vmem:[%s607 + $0x18] sm:$0xf]
        %v615 = vld [vmem:[%s607 + $0x1c] sm:$0xf]
        %v616 = vld [vmem:[%s607 + $0x20] sm:$0xf]
        %v617 = vld [vmem:[%s607 + $0x24] sm:$0xf]
        %v618 = vld [vmem:[%s607 + $0x28] sm:$0xf]
        %v619 = vld [vmem:[%s607 + $0x2c] sm:$0xf]
        %v620 = vld [vmem:[%s607 + $0x30] sm:$0xf]
        %v621 = vld [vmem:[%s607 + $0x34] sm:$0xf]
        %v622 = vld [vmem:[%s607 + $0x38] sm:$0xf]
        %v623 = vld [vmem:[%s607 + $0x3c] sm:$0xf]
        %s624 = scalar_lea.vmem %s2, 128
        %v625 = vld [vmem:[%s624] sm:$0xff]
        %v626 = vld [vmem:[%s624 + $0x8] sm:$0xff]
        %v627 = vld [vmem:[%s624 + $0x10] sm:$0xff]
        %v628 = vld [vmem:[%s624 + $0x18] sm:$0xff]
        %v629 = vld [vmem:[%s624 + $0x20] sm:$0xff]
        %v630 = vld [vmem:[%s624 + $0x28] sm:$0xff]
        %v631 = vld [vmem:[%s624 + $0x30] sm:$0xff]
        %v632 = vld [vmem:[%s624 + $0x38] sm:$0xff]
        %v633 = vld [vmem:[%s624 + $0x40] sm:$0xff]
        %v634 = vld [vmem:[%s624 + $0x48] sm:$0xff]
        %v635 = vld [vmem:[%s624 + $0x50] sm:$0xff]
        %v636 = vld [vmem:[%s624 + $0x58] sm:$0xff]
        %v637 = vld [vmem:[%s624 + $0x60] sm:$0xff]
        %v638 = vld [vmem:[%s624 + $0x68] sm:$0xff]
        %v639 = vld [vmem:[%s624 + $0x70] sm:$0xff]
        %v640 = vld [vmem:[%s624 + $0x78] sm:$0xff]
        %642 = vset.pattern.permute.xlu0 0
        %643 = vperm.xlu0 %642, %v625
        %v644 = vpop.permute.xlu0 %643
        %647 = vset.pattern.permute.xlu0 0
        %648 = vperm.xlu0 %647, %v626
        %v649 = vpop.permute.xlu0 %648
        %652 = vset.pattern.permute.xlu0 0
        %653 = vperm.xlu0 %652, %v627
        %v654 = vpop.permute.xlu0 %653
        %657 = vset.pattern.permute.xlu0 0
        %658 = vperm.xlu0 %657, %v628
        %v659 = vpop.permute.xlu0 %658
        %662 = vset.pattern.permute.xlu0 0
        %663 = vperm.xlu0 %662, %v629
        %v664 = vpop.permute.xlu0 %663
        %667 = vset.pattern.permute.xlu0 0
        %668 = vperm.xlu0 %667, %v630
        %v669 = vpop.permute.xlu0 %668
        %672 = vset.pattern.permute.xlu0 0
        %673 = vperm.xlu0 %672, %v631
        %v674 = vpop.permute.xlu0 %673
        %677 = vset.pattern.permute.xlu0 0
        %678 = vperm.xlu0 %677, %v632
        %v679 = vpop.permute.xlu0 %678
        %682 = vset.pattern.permute.xlu0 0
        %683 = vperm.xlu0 %682, %v633
        %v684 = vpop.permute.xlu0 %683
        %687 = vset.pattern.permute.xlu0 0
        %688 = vperm.xlu0 %687, %v634
        %v689 = vpop.permute.xlu0 %688
        %692 = vset.pattern.permute.xlu0 0
        %693 = vperm.xlu0 %692, %v635
        %v694 = vpop.permute.xlu0 %693
        %697 = vset.pattern.permute.xlu0 0
        %698 = vperm.xlu0 %697, %v636
        %v699 = vpop.permute.xlu0 %698
        %702 = vset.pattern.permute.xlu0 0
        %703 = vperm.xlu0 %702, %v637
        %v704 = vpop.permute.xlu0 %703
        %707 = vset.pattern.permute.xlu0 0
        %708 = vperm.xlu0 %707, %v638
        %v709 = vpop.permute.xlu0 %708
        %712 = vset.pattern.permute.xlu0 0
        %713 = vperm.xlu0 %712, %v639
        %v714 = vpop.permute.xlu0 %713
        %717 = vset.pattern.permute.xlu0 0
        %718 = vperm.xlu0 %717, %v640
        %v719 = vpop.permute.xlu0 %718
        %v737 = vunpack.c.l.b16 %v608
        %v738 = vunpack.c.l.b16 %v609
        %v739 = vunpack.c.l.b16 %v610
        %v740 = vunpack.c.l.b16 %v611
        %v741 = vunpack.c.l.b16 %v612
        %v742 = vunpack.c.l.b16 %v613
        %v743 = vunpack.c.l.b16 %v614
        %v744 = vunpack.c.l.b16 %v615
        %v745 = vunpack.c.l.b16 %v616
        %v746 = vunpack.c.l.b16 %v617
        %v747 = vunpack.c.l.b16 %v618
        %v748 = vunpack.c.l.b16 %v619
        %v749 = vunpack.c.l.b16 %v620
        %v750 = vunpack.c.l.b16 %v621
        %v751 = vunpack.c.l.b16 %v622
        %v752 = vunpack.c.l.b16 %v623
        %v753 = vpack.c.b16 %v738, %v737
        %v754 = vpack.c.b16 %v740, %v739
        %v755 = vpack.c.b16 %v742, %v741
        %v756 = vpack.c.b16 %v744, %v743
        %v757 = vpack.c.b16 %v746, %v745
        %v758 = vpack.c.b16 %v748, %v747
        %v759 = vpack.c.b16 %v750, %v749
        %v760 = vpack.c.b16 %v752, %v751
        %769 = vmatprep.subr.bf16.mxu0 %v592
        %770 = vmatpush1.bf16.msra.mxu0 %v591
        %771 = vmatprep.subr.bf16.mxu0 %v594
        %772 = vmatpush1.bf16.msra.mxu0 %v593
        %773 = vmatprep.subr.bf16.mxu0 %v596
        %774 = vmatpush1.bf16.msra.mxu0 %v595
        %775 = vmatprep.subr.bf16.mxu0 %v598
        %776 = vmatpush1.bf16.msra.mxu0 %v597
        %777 = vmatprep.subr.bf16.mxu0 %v600
        %778 = vmatpush1.bf16.msra.mxu0 %v599
        %779 = vmatprep.subr.bf16.mxu0 %v602
        %780 = vmatpush1.bf16.msra.mxu0 %v601
        %781 = vmatprep.subr.bf16.mxu0 %v604
        %782 = vmatpush1.bf16.msra.mxu0 %v603
        %783 = vmatprep.subr.bf16.mxu0 %v606
        %784 = vmatpush1.bf16.msra.mxu0 %v605
        %785 = vmatprep.subr.bf16.mxu0 0
        %786 = vmatpush1.bf16.msra.mxu0 0
        %787 = vmatprep.subr.bf16.mxu0 0
        %788 = vmatpush1.bf16.msra.mxu0 0
        %789 = vmatprep.subr.bf16.mxu0 0
        %790 = vmatpush1.bf16.msra.mxu0 0
        %791 = vmatprep.subr.bf16.mxu0 0
        %792 = vmatpush1.bf16.msra.mxu0 0
        %793 = vmatprep.subr.bf16.mxu0 0
        %794 = vmatpush1.bf16.msra.mxu0 0
        %795 = vmatprep.subr.bf16.mxu0 0
        %796 = vmatpush1.bf16.msra.mxu0 0
        %797 = vmatprep.subr.bf16.mxu0 0
        %798 = vmatpush1.bf16.msra.mxu0 0
        %799 = vmatprep.subr.bf16.mxu0 0
        %800 = vmatpush1.bf16.msra.mxu0 0
        %801 = vmatprep.mubr.bf16.mxu0 0
        %802 = vmatmul.mubr.bf16.gmra.mrb[0].mxu0 %v753
        %v803 = vpop.f32.mrb[0].mxu0
        %v804 = vadd.f32 %v644, %v803
        %v805 = vpop.f32.mrb[0].mxu0
        %v806 = vadd.f32 %v644, %v805
        %v807 = vpop.f32.mrb[0].mxu0
        %v808 = vadd.f32 %v649, %v807
        %v809 = vpop.f32.mrb[0].mxu0
        %v810 = vadd.f32 %v649, %v809
        %811 = vmatprep.mubr.bf16.mxu0 0
        %812 = vmatmul.mubr.bf16.gmra.mrb[0].mxu0 %v754
        %v813 = vpop.f32.mrb[0].mxu0
        %v814 = vadd.f32 %v654, %v813
        %v815 = vpop.f32.mrb[0].mxu0
        %v816 = vadd.f32 %v654, %v815
        %v817 = vpop.f32.mrb[0].mxu0
        %v818 = vadd.f32 %v659, %v817
        %v819 = vpop.f32.mrb[0].mxu0
        %v820 = vadd.f32 %v659, %v819
        %821 = vmatprep.mubr.bf16.mxu0 0
        %822 = vmatmul.mubr.bf16.gmra.mrb[0].mxu0 %v755
        %v823 = vpop.f32.mrb[0].mxu0
        %v824 = vadd.f32 %v664, %v823
        %v825 = vpop.f32.mrb[0].mxu0
        %v826 = vadd.f32 %v664, %v825
        %v827 = vpop.f32.mrb[0].mxu0
        %v828 = vadd.f32 %v669, %v827
        %v829 = vpop.f32.mrb[0].mxu0
        %v830 = vadd.f32 %v669, %v829
        %831 = vmatprep.mubr.bf16.mxu0 0
        %832 = vmatmul.mubr.bf16.gmra.mrb[0].mxu0 %v756
        %v833 = vpop.f32.mrb[0].mxu0
        %v834 = vadd.f32 %v674, %v833
        %v835 = vpop.f32.mrb[0].mxu0
        %v836 = vadd.f32 %v674, %v835
        %v837 = vpop.f32.mrb[0].mxu0
        %v838 = vadd.f32 %v679, %v837
        %v839 = vpop.f32.mrb[0].mxu0
        %v840 = vadd.f32 %v679, %v839
        %841 = vmatprep.mubr.bf16.mxu0 0
        %842 = vmatmul.mubr.bf16.gmra.mrb[0].mxu0 %v757
        %v843 = vpop.f32.mrb[0].mxu0
        %v844 = vadd.f32 %v684, %v843
        %v845 = vpop.f32.mrb[0].mxu0
        %v846 = vadd.f32 %v684, %v845
        %v847 = vpop.f32.mrb[0].mxu0
        %v848 = vadd.f32 %v689, %v847
        %v849 = vpop.f32.mrb[0].mxu0
        %v850 = vadd.f32 %v689, %v849
        %851 = vmatprep.mubr.bf16.mxu0 0
        %852 = vmatmul.mubr.bf16.gmra.mrb[0].mxu0 %v758
        %v853 = vpop.f32.mrb[0].mxu0
        %v854 = vadd.f32 %v694, %v853
        %v855 = vpop.f32.mrb[0].mxu0
        %v856 = vadd.f32 %v694, %v855
        %v857 = vpop.f32.mrb[0].mxu0
        %v858 = vadd.f32 %v699, %v857
        %v859 = vpop.f32.mrb[0].mxu0
        %v860 = vadd.f32 %v699, %v859
        %861 = vmatprep.mubr.bf16.mxu0 0
        %862 = vmatmul.mubr.bf16.gmra.mrb[0].mxu0 %v759
        %v863 = vpop.f32.mrb[0].mxu0
        %v864 = vadd.f32 %v704, %v863
        %v865 = vpop.f32.mrb[0].mxu0
        %v866 = vadd.f32 %v704, %v865
        %v867 = vpop.f32.mrb[0].mxu0
        %v868 = vadd.f32 %v709, %v867
        %v869 = vpop.f32.mrb[0].mxu0
        %v870 = vadd.f32 %v709, %v869
        %871 = vmatprep.mubr.bf16.mxu0 0
        %872 = vmatmul.mubr.bf16.gmra.mrb[0].mxu0 %v760
        %v873 = vpop.f32.mrb[0].mxu0
        %v874 = vadd.f32 %v714, %v873
        %v875 = vpop.f32.mrb[0].mxu0
        %v876 = vadd.f32 %v714, %v875
        %v877 = vpop.f32.mrb[0].mxu0
        %v878 = vadd.f32 %v719, %v877
        %v879 = vpop.f32.mrb[0].mxu0
        %v880 = vadd.f32 %v719, %v879
        %881 = vdwg.mxu0
        %v882 = vmax.f32 %v804, 0.0
        %v883 = vmax.f32 %v806, 0.0
        %v884 = vmax.f32 %v808, 0.0
        %v885 = vmax.f32 %v810, 0.0
        %v886 = vmax.f32 %v814, 0.0
        %v887 = vmax.f32 %v816, 0.0
        %v888 = vmax.f32 %v818, 0.0
        %v889 = vmax.f32 %v820, 0.0
        %v890 = vmax.f32 %v824, 0.0
        %v891 = vmax.f32 %v826, 0.0
        %v892 = vmax.f32 %v828, 0.0
        %v893 = vmax.f32 %v830, 0.0
        %v894 = vmax.f32 %v834, 0.0
        %v895 = vmax.f32 %v836, 0.0
        %v896 = vmax.f32 %v838, 0.0
        %v897 = vmax.f32 %v840, 0.0
        %v898 = vmax.f32 %v844, 0.0
        %v899 = vmax.f32 %v846, 0.0
        %v900 = vmax.f32 %v848, 0.0
        %v901 = vmax.f32 %v850, 0.0
        %v902 = vmax.f32 %v854, 0.0
        %v903 = vmax.f32 %v856, 0.0
        %v904 = vmax.f32 %v858, 0.0
        %v905 = vmax.f32 %v860, 0.0
        %v906 = vmax.f32 %v864, 0.0
        %v907 = vmax.f32 %v866, 0.0
        %v908 = vmax.f32 %v868, 0.0
        %v909 = vmax.f32 %v870, 0.0
        %v910 = vmax.f32 %v874, 0.0
        %v911 = vmax.f32 %v876, 0.0
        %v912 = vmax.f32 %v878, 0.0
        %v913 = vmax.f32 %v880, 0.0
        %v914 = vpack.c.bf16 %v884, %v882
        %v915 = vpack.c.bf16 %v885, %v883
        %v916 = vpack.c.bf16 %v888, %v886
        %v917 = vpack.c.bf16 %v889, %v887
        %v918 = vpack.c.bf16 %v892, %v890
        %v919 = vpack.c.bf16 %v893, %v891
        %v920 = vpack.c.bf16 %v896, %v894
        %v921 = vpack.c.bf16 %v897, %v895
        %v922 = vpack.c.bf16 %v900, %v898
        %v923 = vpack.c.bf16 %v901, %v899
        %v924 = vpack.c.bf16 %v904, %v902
        %v925 = vpack.c.bf16 %v905, %v903
        %v926 = vpack.c.bf16 %v908, %v906
        %v927 = vpack.c.bf16 %v909, %v907
        %v928 = vpack.c.bf16 %v912, %v910
        %v929 = vpack.c.bf16 %v913, %v911
        %s930 = scalar_lea.vmem %s1, 128
        %v931 = vld [vmem:[%s930] sm:$0xf]
        %v932 = vld [vmem:[%s930 + $0x4] sm:$0xf]
        %v933 = vld [vmem:[%s930 + $0x8] sm:$0xf]
        %v934 = vld [vmem:[%s930 + $0xc] sm:$0xf]
        %v935 = vld [vmem:[%s930 + $0x10] sm:$0xf]
        %v936 = vld [vmem:[%s930 + $0x14] sm:$0xf]
        %v937 = vld [vmem:[%s930 + $0x18] sm:$0xf]
        %v938 = vld [vmem:[%s930 + $0x1c] sm:$0xf]
        %v939 = vld [vmem:[%s930 + $0x20] sm:$0xf]
        %v940 = vld [vmem:[%s930 + $0x24] sm:$0xf]
        %v941 = vld [vmem:[%s930 + $0x28] sm:$0xf]
        %v942 = vld [vmem:[%s930 + $0x2c] sm:$0xf]
        %v943 = vld [vmem:[%s930 + $0x30] sm:$0xf]
        %v944 = vld [vmem:[%s930 + $0x34] sm:$0xf]
        %v945 = vld [vmem:[%s930 + $0x38] sm:$0xf]
        %v946 = vld [vmem:[%s930 + $0x3c] sm:$0xf]
        %s947 = scalar_lea.vmem %s2, 256
        %v948 = vld [vmem:[%s947] sm:$0xff]
        %v949 = vld [vmem:[%s947 + $0x8] sm:$0xff]
        %v950 = vld [vmem:[%s947 + $0x10] sm:$0xff]
        %v951 = vld [vmem:[%s947 + $0x18] sm:$0xff]
        %v952 = vld [vmem:[%s947 + $0x20] sm:$0xff]
        %v953 = vld [vmem:[%s947 + $0x28] sm:$0xff]
        %v954 = vld [vmem:[%s947 + $0x30] sm:$0xff]
        %v955 = vld [vmem:[%s947 + $0x38] sm:$0xff]
        %v956 = vld [vmem:[%s947 + $0x40] sm:$0xff]
        %v957 = vld [vmem:[%s947 + $0x48] sm:$0xff]
        %v958 = vld [vmem:[%s947 + $0x50] sm:$0xff]
        %v959 = vld [vmem:[%s947 + $0x58] sm:$0xff]
        %v960 = vld [vmem:[%s947 + $0x60] sm:$0xff]
        %v961 = vld [vmem:[%s947 + $0x68] sm:$0xff]
        %v962 = vld [vmem:[%s947 + $0x70] sm:$0xff]
        %v963 = vld [vmem:[%s947 + $0x78] sm:$0xff]
        %965 = vset.pattern.permute.xlu0 0
        %966 = vperm.xlu0 %965, %v948
        %v967 = vpop.permute.xlu0 %966
        %970 = vset.pattern.permute.xlu0 0
        %971 = vperm.xlu0 %970, %v949
        %v972 = vpop.permute.xlu0 %971
        %975 = vset.pattern.permute.xlu0 0
        %976 = vperm.xlu0 %975, %v950
        %v977 = vpop.permute.xlu0 %976
        %980 = vset.pattern.permute.xlu0 0
        %981 = vperm.xlu0 %980, %v951
        %v982 = vpop.permute.xlu0 %981
        %985 = vset.pattern.permute.xlu0 0
        %986 = vperm.xlu0 %985, %v952
        %v987 = vpop.permute.xlu0 %986
        %990 = vset.pattern.permute.xlu0 0
        %991 = vperm.xlu0 %990, %v953
        %v992 = vpop.permute.xlu0 %991
        %995 = vset.pattern.permute.xlu0 0
        %996 = vperm.xlu0 %995, %v954
        %v997 = vpop.permute.xlu0 %996
        %1000 = vset.pattern.permute.xlu0 0
        %1001 = vperm.xlu0 %1000, %v955
        %v1002 = vpop.permute.xlu0 %1001
        %1005 = vset.pattern.permute.xlu0 0
        %1006 = vperm.xlu0 %1005, %v956
        %v1007 = vpop.permute.xlu0 %1006
        %1010 = vset.pattern.permute.xlu0 0
        %1011 = vperm.xlu0 %1010, %v957
        %v1012 = vpop.permute.xlu0 %1011
        %1015 = vset.pattern.permute.xlu0 0
        %1016 = vperm.xlu0 %1015, %v958
        %v1017 = vpop.permute.xlu0 %1016
        %1020 = vset.pattern.permute.xlu0 0
        %1021 = vperm.xlu0 %1020, %v959
        %v1022 = vpop.permute.xlu0 %1021
        %1025 = vset.pattern.permute.xlu0 0
        %1026 = vperm.xlu0 %1025, %v960
        %v1027 = vpop.permute.xlu0 %1026
        %1030 = vset.pattern.permute.xlu0 0
        %1031 = vperm.xlu0 %1030, %v961
        %v1032 = vpop.permute.xlu0 %1031
        %1035 = vset.pattern.permute.xlu0 0
        %1036 = vperm.xlu0 %1035, %v962
        %v1037 = vpop.permute.xlu0 %1036
        %1040 = vset.pattern.permute.xlu0 0
        %1041 = vperm.xlu0 %1040, %v963
        %v1042 = vpop.permute.xlu0 %1041
        %v1060 = vunpack.c.l.b16 %v931
        %v1061 = vunpack.c.l.b16 %v932
        %v1062 = vunpack.c.l.b16 %v933
        %v1063 = vunpack.c.l.b16 %v934
        %v1064 = vunpack.c.l.b16 %v935
        %v1065 = vunpack.c.l.b16 %v936
        %v1066 = vunpack.c.l.b16 %v937
        %v1067 = vunpack.c.l.b16 %v938
        %v1068 = vunpack.c.l.b16 %v939
        %v1069 = vunpack.c.l.b16 %v940
        %v1070 = vunpack.c.l.b16 %v941
        %v1071 = vunpack.c.l.b16 %v942
        %v1072 = vunpack.c.l.b16 %v943
        %v1073 = vunpack.c.l.b16 %v944
        %v1074 = vunpack.c.l.b16 %v945
        %v1075 = vunpack.c.l.b16 %v946
        %v1076 = vpack.c.b16 %v1061, %v1060
        %v1077 = vpack.c.b16 %v1063, %v1062
        %v1078 = vpack.c.b16 %v1065, %v1064
        %v1079 = vpack.c.b16 %v1067, %v1066
        %v1080 = vpack.c.b16 %v1069, %v1068
        %v1081 = vpack.c.b16 %v1071, %v1070
        %v1082 = vpack.c.b16 %v1073, %v1072
        %v1083 = vpack.c.b16 %v1075, %v1074
        %1092 = vmatprep.subr.bf16.mxu0 %v915
        %1093 = vmatpush1.bf16.msra.mxu0 %v914
        %1094 = vmatprep.subr.bf16.mxu0 %v917
        %1095 = vmatpush1.bf16.msra.mxu0 %v916
        %1096 = vmatprep.subr.bf16.mxu0 %v919
        %1097 = vmatpush1.bf16.msra.mxu0 %v918
        %1098 = vmatprep.subr.bf16.mxu0 %v921
        %1099 = vmatpush1.bf16.msra.mxu0 %v920
        %1100 = vmatprep.subr.bf16.mxu0 %v923
        %1101 = vmatpush1.bf16.msra.mxu0 %v922
        %1102 = vmatprep.subr.bf16.mxu0 %v925
        %1103 = vmatpush1.bf16.msra.mxu0 %v924
        %1104 = vmatprep.subr.bf16.mxu0 %v927
        %1105 = vmatpush1.bf16.msra.mxu0 %v926
        %1106 = vmatprep.subr.bf16.mxu0 %v929
        %1107 = vmatpush1.bf16.msra.mxu0 %v928
        %1108 = vmatprep.subr.bf16.mxu0 0
        %1109 = vmatpush1.bf16.msra.mxu0 0
        %1110 = vmatprep.subr.bf16.mxu0 0
        %1111 = vmatpush1.bf16.msra.mxu0 0
        %1112 = vmatprep.subr.bf16.mxu0 0
        %1113 = vmatpush1.bf16.msra.mxu0 0
        %1114 = vmatprep.subr.bf16.mxu0 0
        %1115 = vmatpush1.bf16.msra.mxu0 0
        %1116 = vmatprep.subr.bf16.mxu0 0
        %1117 = vmatpush1.bf16.msra.mxu0 0
        %1118 = vmatprep.subr.bf16.mxu0 0
        %1119 = vmatpush1.bf16.msra.mxu0 0
        %1120 = vmatprep.subr.bf16.mxu0 0
        %1121 = vmatpush1.bf16.msra.mxu0 0
        %1122 = vmatprep.subr.bf16.mxu0 0
        %1123 = vmatpush1.bf16.msra.mxu0 0
        %1124 = vmatprep.mubr.bf16.mxu0 0
        %1125 = vmatmul.mubr.bf16.gmra.mrb[0].mxu0 %v1076
        %v1126 = vpop.f32.mrb[0].mxu0
        %v1127 = vadd.f32 %v967, %v1126
        %v1128 = vpop.f32.mrb[0].mxu0
        %v1129 = vadd.f32 %v967, %v1128
        %v1130 = vpop.f32.mrb[0].mxu0
        %v1131 = vadd.f32 %v972, %v1130
        %v1132 = vpop.f32.mrb[0].mxu0
        %v1133 = vadd.f32 %v972, %v1132
        %1134 = vmatprep.mubr.bf16.mxu0 0
        %1135 = vmatmul.mubr.bf16.gmra.mrb[0].mxu0 %v1077
        %v1136 = vpop.f32.mrb[0].mxu0
        %v1137 = vadd.f32 %v977, %v1136
        %v1138 = vpop.f32.mrb[0].mxu0
        %v1139 = vadd.f32 %v977, %v1138
        %v1140 = vpop.f32.mrb[0].mxu0
        %v1141 = vadd.f32 %v982, %v1140
        %v1142 = vpop.f32.mrb[0].mxu0
        %v1143 = vadd.f32 %v982, %v1142
        %1144 = vmatprep.mubr.bf16.mxu0 0
        %1145 = vmatmul.mubr.bf16.gmra.mrb[0].mxu0 %v1078
        %v1146 = vpop.f32.mrb[0].mxu0
        %v1147 = vadd.f32 %v987, %v1146
        %v1148 = vpop.f32.mrb[0].mxu0
        %v1149 = vadd.f32 %v987, %v1148
        %v1150 = vpop.f32.mrb[0].mxu0
        %v1151 = vadd.f32 %v992, %v1150
        %v1152 = vpop.f32.mrb[0].mxu0
        %v1153 = vadd.f32 %v992, %v1152
        %1154 = vmatprep.mubr.bf16.mxu0 0
        %1155 = vmatmul.mubr.bf16.gmra.mrb[0].mxu0 %v1079
        %v1156 = vpop.f32.mrb[0].mxu0
        %v1157 = vadd.f32 %v997, %v1156
        %v1158 = vpop.f32.mrb[0].mxu0
        %v1159 = vadd.f32 %v997, %v1158
        %v1160 = vpop.f32.mrb[0].mxu0
        %v1161 = vadd.f32 %v1002, %v1160
        %v1162 = vpop.f32.mrb[0].mxu0
        %v1163 = vadd.f32 %v1002, %v1162
        %1164 = vmatprep.mubr.bf16.mxu0 0
        %1165 = vmatmul.mubr.bf16.gmra.mrb[0].mxu0 %v1080
        %v1166 = vpop.f32.mrb[0].mxu0
        %v1167 = vadd.f32 %v1007, %v1166
        %v1168 = vpop.f32.mrb[0].mxu0
        %v1169 = vadd.f32 %v1007, %v1168
        %v1170 = vpop.f32.mrb[0].mxu0
        %v1171 = vadd.f32 %v1012, %v1170
        %v1172 = vpop.f32.mrb[0].mxu0
        %v1173 = vadd.f32 %v1012, %v1172
        %1174 = vmatprep.mubr.bf16.mxu0 0
        %1175 = vmatmul.mubr.bf16.gmra.mrb[0].mxu0 %v1081
        %v1176 = vpop.f32.mrb[0].mxu0
        %v1177 = vadd.f32 %v1017, %v1176
        %v1178 = vpop.f32.mrb[0].mxu0
        %v1179 = vadd.f32 %v1017, %v1178
        %v1180 = vpop.f32.mrb[0].mxu0
        %v1181 = vadd.f32 %v1022, %v1180
        %v1182 = vpop.f32.mrb[0].mxu0
        %v1183 = vadd.f32 %v1022, %v1182
        %1184 = vmatprep.mubr.bf16.mxu0 0
        %1185 = vmatmul.mubr.bf16.gmra.mrb[0].mxu0 %v1082
        %v1186 = vpop.f32.mrb[0].mxu0
        %v1187 = vadd.f32 %v1027, %v1186
        %v1188 = vpop.f32.mrb[0].mxu0
        %v1189 = vadd.f32 %v1027, %v1188
        %v1190 = vpop.f32.mrb[0].mxu0
        %v1191 = vadd.f32 %v1032, %v1190
        %v1192 = vpop.f32.mrb[0].mxu0
        %v1193 = vadd.f32 %v1032, %v1192
        %1194 = vmatprep.mubr.bf16.mxu0 0
        %1195 = vmatmul.mubr.bf16.gmra.mrb[0].mxu0 %v1083
        %v1196 = vpop.f32.mrb[0].mxu0
        %v1197 = vadd.f32 %v1037, %v1196
        %v1198 = vpop.f32.mrb[0].mxu0
        %v1199 = vadd.f32 %v1037, %v1198
        %v1200 = vpop.f32.mrb[0].mxu0
        %v1201 = vadd.f32 %v1042, %v1200
        %v1202 = vpop.f32.mrb[0].mxu0
        %v1203 = vadd.f32 %v1042, %v1202
        %1204 = vdwg.mxu0
        %v1205 = vmax.f32 %v1127, 0.0
        %v1206 = vmax.f32 %v1129, 0.0
        %v1207 = vmax.f32 %v1131, 0.0
        %v1208 = vmax.f32 %v1133, 0.0
        %v1209 = vmax.f32 %v1137, 0.0
        %v1210 = vmax.f32 %v1139, 0.0
        %v1211 = vmax.f32 %v1141, 0.0
        %v1212 = vmax.f32 %v1143, 0.0
        %v1213 = vmax.f32 %v1147, 0.0
        %v1214 = vmax.f32 %v1149, 0.0
        %v1215 = vmax.f32 %v1151, 0.0
        %v1216 = vmax.f32 %v1153, 0.0
        %v1217 = vmax.f32 %v1157, 0.0
        %v1218 = vmax.f32 %v1159, 0.0
        %v1219 = vmax.f32 %v1161, 0.0
        %v1220 = vmax.f32 %v1163, 0.0
        %v1221 = vmax.f32 %v1167, 0.0
        %v1222 = vmax.f32 %v1169, 0.0
        %v1223 = vmax.f32 %v1171, 0.0
        %v1224 = vmax.f32 %v1173, 0.0
        %v1225 = vmax.f32 %v1177, 0.0
        %v1226 = vmax.f32 %v1179, 0.0
        %v1227 = vmax.f32 %v1181, 0.0
        %v1228 = vmax.f32 %v1183, 0.0
        %v1229 = vmax.f32 %v1187, 0.0
        %v1230 = vmax.f32 %v1189, 0.0
        %v1231 = vmax.f32 %v1191, 0.0
        %v1232 = vmax.f32 %v1193, 0.0
        %v1233 = vmax.f32 %v1197, 0.0
        %v1234 = vmax.f32 %v1199, 0.0
        %v1235 = vmax.f32 %v1201, 0.0
        %v1236 = vmax.f32 %v1203, 0.0
        %v1237 = vpack.c.bf16 %v1207, %v1205
        %v1238 = vpack.c.bf16 %v1208, %v1206
        %v1239 = vpack.c.bf16 %v1211, %v1209
        %v1240 = vpack.c.bf16 %v1212, %v1210
        %v1241 = vpack.c.bf16 %v1215, %v1213
        %v1242 = vpack.c.bf16 %v1216, %v1214
        %v1243 = vpack.c.bf16 %v1219, %v1217
        %v1244 = vpack.c.bf16 %v1220, %v1218
        %v1245 = vpack.c.bf16 %v1223, %v1221
        %v1246 = vpack.c.bf16 %v1224, %v1222
        %v1247 = vpack.c.bf16 %v1227, %v1225
        %v1248 = vpack.c.bf16 %v1228, %v1226
        %v1249 = vpack.c.bf16 %v1231, %v1229
        %v1250 = vpack.c.bf16 %v1232, %v1230
        %v1251 = vpack.c.bf16 %v1235, %v1233
        %v1252 = vpack.c.bf16 %v1236, %v1234
        %s1253 = scalar_lea.vmem %s1, 192
        %v1254 = vld [vmem:[%s1253] sm:$0xf]
        %v1255 = vld [vmem:[%s1253 + $0x4] sm:$0xf]
        %v1256 = vld [vmem:[%s1253 + $0x8] sm:$0xf]
        %v1257 = vld [vmem:[%s1253 + $0xc] sm:$0xf]
        %v1258 = vld [vmem:[%s1253 + $0x10] sm:$0xf]
        %v1259 = vld [vmem:[%s1253 + $0x14] sm:$0xf]
        %v1260 = vld [vmem:[%s1253 + $0x18] sm:$0xf]
        %v1261 = vld [vmem:[%s1253 + $0x1c] sm:$0xf]
        %v1262 = vld [vmem:[%s1253 + $0x20] sm:$0xf]
        %v1263 = vld [vmem:[%s1253 + $0x24] sm:$0xf]
        %v1264 = vld [vmem:[%s1253 + $0x28] sm:$0xf]
        %v1265 = vld [vmem:[%s1253 + $0x2c] sm:$0xf]
        %v1266 = vld [vmem:[%s1253 + $0x30] sm:$0xf]
        %v1267 = vld [vmem:[%s1253 + $0x34] sm:$0xf]
        %v1268 = vld [vmem:[%s1253 + $0x38] sm:$0xf]
        %v1269 = vld [vmem:[%s1253 + $0x3c] sm:$0xf]
        %s1270 = scalar_lea.vmem %s2, 384
        %v1271 = vld [vmem:[%s1270] sm:$0xff]
        %v1272 = vld [vmem:[%s1270 + $0x8] sm:$0xff]
        %v1273 = vld [vmem:[%s1270 + $0x10] sm:$0xff]
        %v1274 = vld [vmem:[%s1270 + $0x18] sm:$0xff]
        %v1275 = vld [vmem:[%s1270 + $0x20] sm:$0xff]
        %v1276 = vld [vmem:[%s1270 + $0x28] sm:$0xff]
        %v1277 = vld [vmem:[%s1270 + $0x30] sm:$0xff]
        %v1278 = vld [vmem:[%s1270 + $0x38] sm:$0xff]
        %v1279 = vld [vmem:[%s1270 + $0x40] sm:$0xff]
        %v1280 = vld [vmem:[%s1270 + $0x48] sm:$0xff]
        %v1281 = vld [vmem:[%s1270 + $0x50] sm:$0xff]
        %v1282 = vld [vmem:[%s1270 + $0x58] sm:$0xff]
        %v1283 = vld [vmem:[%s1270 + $0x60] sm:$0xff]
        %v1284 = vld [vmem:[%s1270 + $0x68] sm:$0xff]
        %v1285 = vld [vmem:[%s1270 + $0x70] sm:$0xff]
        %v1286 = vld [vmem:[%s1270 + $0x78] sm:$0xff]
        %1288 = vset.pattern.permute.xlu0 0
        %1289 = vperm.xlu0 %1288, %v1271
        %v1290 = vpop.permute.xlu0 %1289
        %1293 = vset.pattern.permute.xlu0 0
        %1294 = vperm.xlu0 %1293, %v1272
        %v1295 = vpop.permute.xlu0 %1294
        %1298 = vset.pattern.permute.xlu0 0
        %1299 = vperm.xlu0 %1298, %v1273
        %v1300 = vpop.permute.xlu0 %1299
        %1303 = vset.pattern.permute.xlu0 0
        %1304 = vperm.xlu0 %1303, %v1274
        %v1305 = vpop.permute.xlu0 %1304
        %1308 = vset.pattern.permute.xlu0 0
        %1309 = vperm.xlu0 %1308, %v1275
        %v1310 = vpop.permute.xlu0 %1309
        %1313 = vset.pattern.permute.xlu0 0
        %1314 = vperm.xlu0 %1313, %v1276
        %v1315 = vpop.permute.xlu0 %1314
        %1318 = vset.pattern.permute.xlu0 0
        %1319 = vperm.xlu0 %1318, %v1277
        %v1320 = vpop.permute.xlu0 %1319
        %1323 = vset.pattern.permute.xlu0 0
        %1324 = vperm.xlu0 %1323, %v1278
        %v1325 = vpop.permute.xlu0 %1324
        %1328 = vset.pattern.permute.xlu0 0
        %1329 = vperm.xlu0 %1328, %v1279
        %v1330 = vpop.permute.xlu0 %1329
        %1333 = vset.pattern.permute.xlu0 0
        %1334 = vperm.xlu0 %1333, %v1280
        %v1335 = vpop.permute.xlu0 %1334
        %1338 = vset.pattern.permute.xlu0 0
        %1339 = vperm.xlu0 %1338, %v1281
        %v1340 = vpop.permute.xlu0 %1339
        %1343 = vset.pattern.permute.xlu0 0
        %1344 = vperm.xlu0 %1343, %v1282
        %v1345 = vpop.permute.xlu0 %1344
        %1348 = vset.pattern.permute.xlu0 0
        %1349 = vperm.xlu0 %1348, %v1283
        %v1350 = vpop.permute.xlu0 %1349
        %1353 = vset.pattern.permute.xlu0 0
        %1354 = vperm.xlu0 %1353, %v1284
        %v1355 = vpop.permute.xlu0 %1354
        %1358 = vset.pattern.permute.xlu0 0
        %1359 = vperm.xlu0 %1358, %v1285
        %v1360 = vpop.permute.xlu0 %1359
        %1363 = vset.pattern.permute.xlu0 0
        %1364 = vperm.xlu0 %1363, %v1286
        %v1365 = vpop.permute.xlu0 %1364
        %v1383 = vunpack.c.l.b16 %v1254
        %v1384 = vunpack.c.l.b16 %v1255
        %v1385 = vunpack.c.l.b16 %v1256
        %v1386 = vunpack.c.l.b16 %v1257
        %v1387 = vunpack.c.l.b16 %v1258
        %v1388 = vunpack.c.l.b16 %v1259
        %v1389 = vunpack.c.l.b16 %v1260
        %v1390 = vunpack.c.l.b16 %v1261
        %v1391 = vunpack.c.l.b16 %v1262
        %v1392 = vunpack.c.l.b16 %v1263
        %v1393 = vunpack.c.l.b16 %v1264
        %v1394 = vunpack.c.l.b16 %v1265
        %v1395 = vunpack.c.l.b16 %v1266
        %v1396 = vunpack.c.l.b16 %v1267
        %v1397 = vunpack.c.l.b16 %v1268
        %v1398 = vunpack.c.l.b16 %v1269
        %v1399 = vpack.c.b16 %v1384, %v1383
        %v1400 = vpack.c.b16 %v1386, %v1385
        %v1401 = vpack.c.b16 %v1388, %v1387
        %v1402 = vpack.c.b16 %v1390, %v1389
        %v1403 = vpack.c.b16 %v1392, %v1391
        %v1404 = vpack.c.b16 %v1394, %v1393
        %v1405 = vpack.c.b16 %v1396, %v1395
        %v1406 = vpack.c.b16 %v1398, %v1397
        %1415 = vmatprep.subr.bf16.mxu0 %v1238
        %1416 = vmatpush1.bf16.msra.mxu0 %v1237
        %1417 = vmatprep.subr.bf16.mxu0 %v1240
        %1418 = vmatpush1.bf16.msra.mxu0 %v1239
        %1419 = vmatprep.subr.bf16.mxu0 %v1242
        %1420 = vmatpush1.bf16.msra.mxu0 %v1241
        %1421 = vmatprep.subr.bf16.mxu0 %v1244
        %1422 = vmatpush1.bf16.msra.mxu0 %v1243
        %1423 = vmatprep.subr.bf16.mxu0 %v1246
        %1424 = vmatpush1.bf16.msra.mxu0 %v1245
        %1425 = vmatprep.subr.bf16.mxu0 %v1248
        %1426 = vmatpush1.bf16.msra.mxu0 %v1247
        %1427 = vmatprep.subr.bf16.mxu0 %v1250
        %1428 = vmatpush1.bf16.msra.mxu0 %v1249
        %1429 = vmatprep.subr.bf16.mxu0 %v1252
        %1430 = vmatpush1.bf16.msra.mxu0 %v1251
        %1431 = vmatprep.subr.bf16.mxu0 0
        %1432 = vmatpush1.bf16.msra.mxu0 0
        %1433 = vmatprep.subr.bf16.mxu0 0
        %1434 = vmatpush1.bf16.msra.mxu0 0
        %1435 = vmatprep.subr.bf16.mxu0 0
        %1436 = vmatpush1.bf16.msra.mxu0 0
        %1437 = vmatprep.subr.bf16.mxu0 0
        %1438 = vmatpush1.bf16.msra.mxu0 0
        %1439 = vmatprep.subr.bf16.mxu0 0
        %1440 = vmatpush1.bf16.msra.mxu0 0
        %1441 = vmatprep.subr.bf16.mxu0 0
        %1442 = vmatpush1.bf16.msra.mxu0 0
        %1443 = vmatprep.subr.bf16.mxu0 0
        %1444 = vmatpush1.bf16.msra.mxu0 0
        %1445 = vmatprep.subr.bf16.mxu0 0
        %1446 = vmatpush1.bf16.msra.mxu0 0
        %1447 = vmatprep.mubr.bf16.mxu0 0
        %1448 = vmatmul.mubr.bf16.gmra.mrb[0].mxu0 %v1399
        %v1449 = vpop.f32.mrb[0].mxu0
        %v1450 = vadd.f32 %v1290, %v1449
        %v1451 = vpop.f32.mrb[0].mxu0
        %v1452 = vadd.f32 %v1290, %v1451
        %v1453 = vpop.f32.mrb[0].mxu0
        %v1454 = vadd.f32 %v1295, %v1453
        %v1455 = vpop.f32.mrb[0].mxu0
        %v1456 = vadd.f32 %v1295, %v1455
        %1457 = vmatprep.mubr.bf16.mxu0 0
        %1458 = vmatmul.mubr.bf16.gmra.mrb[0].mxu0 %v1400
        %v1459 = vpop.f32.mrb[0].mxu0
        %v1460 = vadd.f32 %v1300, %v1459
        %v1461 = vpop.f32.mrb[0].mxu0
        %v1462 = vadd.f32 %v1300, %v1461
        %v1463 = vpop.f32.mrb[0].mxu0
        %v1464 = vadd.f32 %v1305, %v1463
        %v1465 = vpop.f32.mrb[0].mxu0
        %v1466 = vadd.f32 %v1305, %v1465
        %1467 = vmatprep.mubr.bf16.mxu0 0
        %1468 = vmatmul.mubr.bf16.gmra.mrb[0].mxu0 %v1401
        %v1469 = vpop.f32.mrb[0].mxu0
        %v1470 = vadd.f32 %v1310, %v1469
        %v1471 = vpop.f32.mrb[0].mxu0
        %v1472 = vadd.f32 %v1310, %v1471
        %v1473 = vpop.f32.mrb[0].mxu0
        %v1474 = vadd.f32 %v1315, %v1473
        %v1475 = vpop.f32.mrb[0].mxu0
        %v1476 = vadd.f32 %v1315, %v1475
        %1477 = vmatprep.mubr.bf16.mxu0 0
        %1478 = vmatmul.mubr.bf16.gmra.mrb[0].mxu0 %v1402
        %v1479 = vpop.f32.mrb[0].mxu0
        %v1480 = vadd.f32 %v1320, %v1479
        %v1481 = vpop.f32.mrb[0].mxu0
        %v1482 = vadd.f32 %v1320, %v1481
        %v1483 = vpop.f32.mrb[0].mxu0
        %v1484 = vadd.f32 %v1325, %v1483
        %v1485 = vpop.f32.mrb[0].mxu0
        %v1486 = vadd.f32 %v1325, %v1485
        %1487 = vmatprep.mubr.bf16.mxu0 0
        %1488 = vmatmul.mubr.bf16.gmra.mrb[0].mxu0 %v1403
        %v1489 = vpop.f32.mrb[0].mxu0
        %v1490 = vadd.f32 %v1330, %v1489
        %v1491 = vpop.f32.mrb[0].mxu0
        %v1492 = vadd.f32 %v1330, %v1491
        %v1493 = vpop.f32.mrb[0].mxu0
        %v1494 = vadd.f32 %v1335, %v1493
        %v1495 = vpop.f32.mrb[0].mxu0
        %v1496 = vadd.f32 %v1335, %v1495
        %1497 = vmatprep.mubr.bf16.mxu0 0
        %1498 = vmatmul.mubr.bf16.gmra.mrb[0].mxu0 %v1404
        %v1499 = vpop.f32.mrb[0].mxu0
        %v1500 = vadd.f32 %v1340, %v1499
        %v1501 = vpop.f32.mrb[0].mxu0
        %v1502 = vadd.f32 %v1340, %v1501
        %v1503 = vpop.f32.mrb[0].mxu0
        %v1504 = vadd.f32 %v1345, %v1503
        %v1505 = vpop.f32.mrb[0].mxu0
        %v1506 = vadd.f32 %v1345, %v1505
        %1507 = vmatprep.mubr.bf16.mxu0 0
        %1508 = vmatmul.mubr.bf16.gmra.mrb[0].mxu0 %v1405
        %v1509 = vpop.f32.mrb[0].mxu0
        %v1510 = vadd.f32 %v1350, %v1509
        %v1511 = vpop.f32.mrb[0].mxu0
        %v1512 = vadd.f32 %v1350, %v1511
        %v1513 = vpop.f32.mrb[0].mxu0
        %v1514 = vadd.f32 %v1355, %v1513
        %v1515 = vpop.f32.mrb[0].mxu0
        %v1516 = vadd.f32 %v1355, %v1515
        %1517 = vmatprep.mubr.bf16.mxu0 0
        %1518 = vmatmul.mubr.bf16.gmra.mrb[0].mxu0 %v1406
        %v1519 = vpop.f32.mrb[0].mxu0
        %v1520 = vadd.f32 %v1360, %v1519
        %v1521 = vpop.f32.mrb[0].mxu0
        %v1522 = vadd.f32 %v1360, %v1521
        %v1523 = vpop.f32.mrb[0].mxu0
        %v1524 = vadd.f32 %v1365, %v1523
        %v1525 = vpop.f32.mrb[0].mxu0
        %v1526 = vadd.f32 %v1365, %v1525
        %1527 = vdwg.mxu0
        %v1528 = vmax.f32 %v1450, 0.0
        %v1529 = vmax.f32 %v1452, 0.0
        %v1530 = vmax.f32 %v1454, 0.0
        %v1531 = vmax.f32 %v1456, 0.0
        %v1532 = vmax.f32 %v1460, 0.0
        %v1533 = vmax.f32 %v1462, 0.0
        %v1534 = vmax.f32 %v1464, 0.0
        %v1535 = vmax.f32 %v1466, 0.0
        %v1536 = vmax.f32 %v1470, 0.0
        %v1537 = vmax.f32 %v1472, 0.0
        %v1538 = vmax.f32 %v1474, 0.0
        %v1539 = vmax.f32 %v1476, 0.0
        %v1540 = vmax.f32 %v1480, 0.0
        %v1541 = vmax.f32 %v1482, 0.0
        %v1542 = vmax.f32 %v1484, 0.0
        %v1543 = vmax.f32 %v1486, 0.0
        %v1544 = vmax.f32 %v1490, 0.0
        %v1545 = vmax.f32 %v1492, 0.0
        %v1546 = vmax.f32 %v1494, 0.0
        %v1547 = vmax.f32 %v1496, 0.0
        %v1548 = vmax.f32 %v1500, 0.0
        %v1549 = vmax.f32 %v1502, 0.0
        %v1550 = vmax.f32 %v1504, 0.0
        %v1551 = vmax.f32 %v1506, 0.0
        %v1552 = vmax.f32 %v1510, 0.0
        %v1553 = vmax.f32 %v1512, 0.0
        %v1554 = vmax.f32 %v1514, 0.0
        %v1555 = vmax.f32 %v1516, 0.0
        %v1556 = vmax.f32 %v1520, 0.0
        %v1557 = vmax.f32 %v1522, 0.0
        %v1558 = vmax.f32 %v1524, 0.0
        %v1559 = vmax.f32 %v1526, 0.0
        %v1560 = vpack.c.bf16 %v1530, %v1528
        %v1561 = vpack.c.bf16 %v1531, %v1529
        %v1562 = vpack.c.bf16 %v1534, %v1532
        %v1563 = vpack.c.bf16 %v1535, %v1533
        %v1564 = vpack.c.bf16 %v1538, %v1536
        %v1565 = vpack.c.bf16 %v1539, %v1537
        %v1566 = vpack.c.bf16 %v1542, %v1540
        %v1567 = vpack.c.bf16 %v1543, %v1541
        %v1568 = vpack.c.bf16 %v1546, %v1544
        %v1569 = vpack.c.bf16 %v1547, %v1545
        %v1570 = vpack.c.bf16 %v1550, %v1548
        %v1571 = vpack.c.bf16 %v1551, %v1549
        %v1572 = vpack.c.bf16 %v1554, %v1552
        %v1573 = vpack.c.bf16 %v1555, %v1553
        %v1574 = vpack.c.bf16 %v1558, %v1556
        %v1575 = vpack.c.bf16 %v1559, %v1557
        %s1576 = scalar_lea.vmem %s1, 256
        %v1577 = vld [vmem:[%s1576] sm:$0xf]
        %v1578 = vld [vmem:[%s1576 + $0x4] sm:$0xf]
        %v1579 = vld [vmem:[%s1576 + $0x8] sm:$0xf]
        %v1580 = vld [vmem:[%s1576 + $0xc] sm:$0xf]
        %v1581 = vld [vmem:[%s1576 + $0x10] sm:$0xf]
        %v1582 = vld [vmem:[%s1576 + $0x14] sm:$0xf]
        %v1583 = vld [vmem:[%s1576 + $0x18] sm:$0xf]
        %v1584 = vld [vmem:[%s1576 + $0x1c] sm:$0xf]
        %v1585 = vld [vmem:[%s1576 + $0x20] sm:$0xf]
        %v1586 = vld [vmem:[%s1576 + $0x24] sm:$0xf]
        %v1587 = vld [vmem:[%s1576 + $0x28] sm:$0xf]
        %v1588 = vld [vmem:[%s1576 + $0x2c] sm:$0xf]
        %v1589 = vld [vmem:[%s1576 + $0x30] sm:$0xf]
        %v1590 = vld [vmem:[%s1576 + $0x34] sm:$0xf]
        %v1591 = vld [vmem:[%s1576 + $0x38] sm:$0xf]
        %v1592 = vld [vmem:[%s1576 + $0x3c] sm:$0xf]
        %s1593 = scalar_lea.vmem %s2, 512
        %v1594 = vld [vmem:[%s1593] sm:$0xff]
        %v1595 = vld [vmem:[%s1593 + $0x8] sm:$0xff]
        %v1596 = vld [vmem:[%s1593 + $0x10] sm:$0xff]
        %v1597 = vld [vmem:[%s1593 + $0x18] sm:$0xff]
        %v1598 = vld [vmem:[%s1593 + $0x20] sm:$0xff]
        %v1599 = vld [vmem:[%s1593 + $0x28] sm:$0xff]
        %v1600 = vld [vmem:[%s1593 + $0x30] sm:$0xff]
        %v1601 = vld [vmem:[%s1593 + $0x38] sm:$0xff]
        %v1602 = vld [vmem:[%s1593 + $0x40] sm:$0xff]
        %v1603 = vld [vmem:[%s1593 + $0x48] sm:$0xff]
        %v1604 = vld [vmem:[%s1593 + $0x50] sm:$0xff]
        %v1605 = vld [vmem:[%s1593 + $0x58] sm:$0xff]
        %v1606 = vld [vmem:[%s1593 + $0x60] sm:$0xff]
        %v1607 = vld [vmem:[%s1593 + $0x68] sm:$0xff]
        %v1608 = vld [vmem:[%s1593 + $0x70] sm:$0xff]
        %v1609 = vld [vmem:[%s1593 + $0x78] sm:$0xff]
        %1611 = vset.pattern.permute.xlu0 0
        %1612 = vperm.xlu0 %1611, %v1594
        %v1613 = vpop.permute.xlu0 %1612
        %1616 = vset.pattern.permute.xlu0 0
        %1617 = vperm.xlu0 %1616, %v1595
        %v1618 = vpop.permute.xlu0 %1617
        %1620 = vset.pattern.permute.xlu0 0
        %1621 = vperm.xlu0 %1620, %v1596
        %v1622 = vpop.permute.xlu0 %1621
        %1624 = vset.pattern.permute.xlu0 0
        %1625 = vperm.xlu0 %1624, %v1597
        %v1626 = vpop.permute.xlu0 %1625
        %1628 = vset.pattern.permute.xlu0 0
        %1629 = vperm.xlu0 %1628, %v1598
        %v1630 = vpop.permute.xlu0 %1629
        %1632 = vset.pattern.permute.xlu0 0
        %1633 = vperm.xlu0 %1632, %v1599
        %v1634 = vpop.permute.xlu0 %1633
        %1636 = vset.pattern.permute.xlu0 0
        %1637 = vperm.xlu0 %1636, %v1600
        %v1638 = vpop.permute.xlu0 %1637
        %1640 = vset.pattern.permute.xlu0 0
        %1641 = vperm.xlu0 %1640, %v1601
        %v1642 = vpop.permute.xlu0 %1641
        %1644 = vset.pattern.permute.xlu0 0
        %1645 = vperm.xlu0 %1644, %v1602
        %v1646 = vpop.permute.xlu0 %1645
        %1648 = vset.pattern.permute.xlu0 0
        %1649 = vperm.xlu0 %1648, %v1603
        %v1650 = vpop.permute.xlu0 %1649
        %1652 = vset.pattern.permute.xlu0 0
        %1653 = vperm.xlu0 %1652, %v1604
        %v1654 = vpop.permute.xlu0 %1653
        %1656 = vset.pattern.permute.xlu0 0
        %1657 = vperm.xlu0 %1656, %v1605
        %v1658 = vpop.permute.xlu0 %1657
        %1660 = vset.pattern.permute.xlu0 0
        %1661 = vperm.xlu0 %1660, %v1606
        %v1662 = vpop.permute.xlu0 %1661
        %1664 = vset.pattern.permute.xlu0 0
        %1665 = vperm.xlu0 %1664, %v1607
        %v1666 = vpop.permute.xlu0 %1665
        %1668 = vset.pattern.permute.xlu0 0
        %1669 = vperm.xlu0 %1668, %v1608
        %v1670 = vpop.permute.xlu0 %1669
        %1672 = vset.pattern.permute.xlu0 0
        %1673 = vperm.xlu0 %1672, %v1609
        %v1674 = vpop.permute.xlu0 %1673
        %v1691 = vunpack.c.l.b16 %v1577
        %v1692 = vunpack.c.l.b16 %v1578
        %v1693 = vunpack.c.l.b16 %v1579
        %v1694 = vunpack.c.l.b16 %v1580
        %v1695 = vunpack.c.l.b16 %v1581
        %v1696 = vunpack.c.l.b16 %v1582
        %v1697 = vunpack.c.l.b16 %v1583
        %v1698 = vunpack.c.l.b16 %v1584
        %v1699 = vunpack.c.l.b16 %v1585
        %v1700 = vunpack.c.l.b16 %v1586
        %v1701 = vunpack.c.l.b16 %v1587
        %v1702 = vunpack.c.l.b16 %v1588
        %v1703 = vunpack.c.l.b16 %v1589
        %v1704 = vunpack.c.l.b16 %v1590
        %v1705 = vunpack.c.l.b16 %v1591
        %v1706 = vunpack.c.l.b16 %v1592
        %v1707 = vpack.c.b16 %v1692, %v1691
        %v1708 = vpack.c.b16 %v1694, %v1693
        %v1709 = vpack.c.b16 %v1696, %v1695
        %v1710 = vpack.c.b16 %v1698, %v1697
        %v1711 = vpack.c.b16 %v1700, %v1699
        %v1712 = vpack.c.b16 %v1702, %v1701
        %v1713 = vpack.c.b16 %v1704, %v1703
        %v1714 = vpack.c.b16 %v1706, %v1705
        %1723 = vmatprep.subr.bf16.mxu0 %v1561
        %1724 = vmatpush1.bf16.msra.mxu0 %v1560
        %1725 = vmatprep.subr.bf16.mxu0 %v1563
        %1726 = vmatpush1.bf16.msra.mxu0 %v1562
        %1727 = vmatprep.subr.bf16.mxu0 %v1565
        %1728 = vmatpush1.bf16.msra.mxu0 %v1564
        %1729 = vmatprep.subr.bf16.mxu0 %v1567
        %1730 = vmatpush1.bf16.msra.mxu0 %v1566
        %1731 = vmatprep.subr.bf16.mxu0 %v1569
        %1732 = vmatpush1.bf16.msra.mxu0 %v1568
        %1733 = vmatprep.subr.bf16.mxu0 %v1571
        %1734 = vmatpush1.bf16.msra.mxu0 %v1570
        %1735 = vmatprep.subr.bf16.mxu0 %v1573
        %1736 = vmatpush1.bf16.msra.mxu0 %v1572
        %1737 = vmatprep.subr.bf16.mxu0 %v1575
        %1738 = vmatpush1.bf16.msra.mxu0 %v1574
        %1739 = vmatprep.subr.bf16.mxu0 0
        %1740 = vmatpush1.bf16.msra.mxu0 0
        %1741 = vmatprep.subr.bf16.mxu0 0
        %1742 = vmatpush1.bf16.msra.mxu0 0
        %1743 = vmatprep.subr.bf16.mxu0 0
        %1744 = vmatpush1.bf16.msra.mxu0 0
        %1745 = vmatprep.subr.bf16.mxu0 0
        %1746 = vmatpush1.bf16.msra.mxu0 0
        %1747 = vmatprep.subr.bf16.mxu0 0
        %1748 = vmatpush1.bf16.msra.mxu0 0
        %1749 = vmatprep.subr.bf16.mxu0 0
        %1750 = vmatpush1.bf16.msra.mxu0 0
        %1751 = vmatprep.subr.bf16.mxu0 0
        %1752 = vmatpush1.bf16.msra.mxu0 0
        %1753 = vmatprep.subr.bf16.mxu0 0
        %1754 = vmatpush1.bf16.msra.mxu0 0
        %1755 = vmatprep.mubr.bf16.mxu0 0
        %1756 = vmatmul.mubr.bf16.gmra.mrb[0].mxu0 %v1707
        %v1757 = vpop.f32.mrb[0].mxu0
        %v1758 = vadd.f32 %v1613, %v1757
        %v1759 = vpop.f32.mrb[0].mxu0
        %v1760 = vadd.f32 %v1613, %v1759
        %v1761 = vpop.f32.mrb[0].mxu0
        %v1762 = vpop.f32.mrb[0].mxu0
        %1763 = vmatprep.mubr.bf16.mxu0 0
        %1764 = vmatmul.mubr.bf16.gmra.mrb[0].mxu0 %v1708
        %v1765 = vpop.f32.mrb[0].mxu0
        %v1766 = vpop.f32.mrb[0].mxu0
        %v1767 = vpop.f32.mrb[0].mxu0
        %v1768 = vpop.f32.mrb[0].mxu0
        %1769 = vmatprep.mubr.bf16.mxu0 0
        %1770 = vmatmul.mubr.bf16.gmra.mrb[0].mxu0 %v1709
        %v1771 = vpop.f32.mrb[0].mxu0
        %v1772 = vpop.f32.mrb[0].mxu0
        %v1773 = vpop.f32.mrb[0].mxu0
        %v1774 = vpop.f32.mrb[0].mxu0
        %1775 = vmatprep.mubr.bf16.mxu0 0
        %1776 = vmatmul.mubr.bf16.gmra.mrb[0].mxu0 %v1710
        %v1777 = vpop.f32.mrb[0].mxu0
        %v1778 = vpop.f32.mrb[0].mxu0
        %v1779 = vpop.f32.mrb[0].mxu0
        %v1780 = vpop.f32.mrb[0].mxu0
        %1781 = vmatprep.mubr.bf16.mxu0 0
        %1782 = vmatmul.mubr.bf16.gmra.mrb[0].mxu0 %v1711
        %v1783 = vpop.f32.mrb[0].mxu0
        %v1784 = vpop.f32.mrb[0].mxu0
        %v1785 = vpop.f32.mrb[0].mxu0
        %v1786 = vpop.f32.mrb[0].mxu0
        %1787 = vmatprep.mubr.bf16.mxu0 0
        %1788 = vmatmul.mubr.bf16.gmra.mrb[0].mxu0 %v1712
        %v1789 = vpop.f32.mrb[0].mxu0
        %v1790 = vpop.f32.mrb[0].mxu0
        %v1791 = vpop.f32.mrb[0].mxu0
        %v1792 = vpop.f32.mrb[0].mxu0
        %1793 = vmatprep.mubr.bf16.mxu0 0
        %1794 = vmatmul.mubr.bf16.gmra.mrb[0].mxu0 %v1713
        %v1795 = vpop.f32.mrb[0].mxu0
        %v1796 = vpop.f32.mrb[0].mxu0
        %v1797 = vpop.f32.mrb[0].mxu0
        %v1798 = vpop.f32.mrb[0].mxu0
        %1799 = vmatprep.mubr.bf16.mxu0 0
        %1800 = vmatmul.mubr.bf16.gmra.mrb[0].mxu0 %v1714
        %v1801 = vpop.f32.mrb[0].mxu0
        %v1802 = vpop.f32.mrb[0].mxu0
        %v1803 = vpop.f32.mrb[0].mxu0
        %v1804 = vpop.f32.mrb[0].mxu0
        %1805 = vdwg.mxu0
        %v1808 = vcombine.low %v1758, %v1760
        %1810 = vst [vmem:[%s164] sm:$0x77] %v1808
        %s1811 = sand.u32 %s93, 1
        %s1812 = scalar_lea.sflag [#allocation3], %s1811
        %s1813 = sand.u32 %s93, 1
        %s1814 = smul.addr %s1813, 8
        %s1815 = scalar_lea.vmem [#allocation2], %s1814
        // Predicated region
        $region33: #{tpu_custom_call.1} parent=31 // pred_check
          %p1816 = pneg %p103
        $region34: #{tpu_custom_call.1} parent=31 // pred_check_branch
          %1818 = sbr.rel (%p1816) target = $region36
        $region35: #{tpu_custom_call.1} parent=31 // pred_region
          %s1819 = smul.u32 2, %s17
          %s1821 = ssub.s32 128, 128
          %1822 = vsyncadd %s1812, %s1821
          %s1823 = smul.addr %s1819, 64
          %s1824 = scalar_lea.hbm %s3, %s1823
          %s1826 = sshll.u32 %s1815, 4
          %s1827 = int_to_ptr.vmem [resolvable:$true] %s1826
          %1829 = dma.vmem_to_hbm [thread:$0]  %s1827, 128, %s1824, %s1812
        $region36: #{tpu_custom_call.1} parent=31 // pred_fallthru
          _
      $region32: #{tpu_custom_call.1} parent=5 // pred_fallthru
        _
      %p1830 = scmp.le.s32.totalorder 2, %s12
      // Predicated region
      $region37: #{tpu_custom_call.1} parent=5 // pred_check
        %p1831 = pneg %p1830
      $region38: #{tpu_custom_call.1} parent=5 // pred_check_branch
        %1833 = sbr.rel (%p1831) target = $region40
      $region39: #{tpu_custom_call.1} parent=5 // pred_region
        %s1834 = ssub.s32 %s12, 2
        // Predicated region
        $region41: #{tpu_custom_call.1} parent=39 // pred_check
          %p1835 = pneg %p109
        $region42: #{tpu_custom_call.1} parent=39 // pred_check_branch
          %1837 = sbr.rel (%p1835) target = $region44
        $region43: #{tpu_custom_call.1} parent=39 // pred_region
          %s1838 = sand.u32 %s94, 1
          %s1839 = scalar_lea.sflag [#allocation3], %s1838
          %s1840 = sand.u32 %s94, 1
          %s1841 = smul.addr %s1840, 8
          %s1842 = scalar_lea.vmem [#allocation2], %s1841
          %1843 = dma.done %s1839, 128
        $region44: #{tpu_custom_call.1} parent=39 // pred_fallthru
          _
      $region40: #{tpu_custom_call.1} parent=5 // pred_fallthru
        _
    $region6: #{tpu_custom_call.1} parent=1 // loop_footer
      %s16 = sadd.s32 1, %s12
    $region7: #{tpu_custom_call.1} parent=1 // loop_footer_branch
      %11 = sbr.rel target = $region3
    $region8: #{tpu_custom_call.1} parent=1 // loop_exit
      _
    %1844 = vsyncpa [#allocation3], 1
    %s1845 = scalar_lea.sflag [#allocation3], 1
    %1846 = vsyncpa %s1845, 1

</llo_original>
